<compile_context>
chip_gen: v7x
topology: tpu7x:2x2x1
jax: 0.10.0
libtpu: 0.0.40
codegen_flags: <defaults>
</compile_context>

<pallas_src>
import jax
import jax.numpy as jnp
import numpy as np
from jax import lax
from jax.experimental import pallas as pl
from jax.experimental.pallas import tpu as pltpu  # noqa: F401  (TPU-specific hooks)

# ----------------------------- model dims -----------------------------------
B = 2        # batch
T = 8        # sequence length
D = 16       # input_dim
H = 32       # hidden_dim (4*H = 128 lanes -> one full vreg of gates)
FC1 = 25     # fc1 out features
FC2 = 1      # fc2 out features

BP = 8       # batch padded to a full f32 sublane tile
FC1_P = 128  # fc1 width padded to a full lane tile

# packed-weight row offsets (all multiples of 8 -> sublane-aligned ref slices)
_W_IH0 = 0
_W_HH0 = _W_IH0 + D          # 16
_W_L1 = _W_HH0 + H           # 48   ([wih1; whh1], 2H rows)
_W_FC1 = _W_L1 + 2 * H       # 112
_W_FC2 = _W_FC1 + H          # 144
_W_END = _W_FC2 + FC1_P      # 272


# ------------------------------ Pallas kernel -------------------------------
def lstm_kernel(x_ref, w_ref, b_ref, out_ref):
    # x_ref: (T*BP, D) time-major, batch-padded, flattened rows.
    # w_ref: (272, 128) packed weights, b_ref: (4, 128) packed biases.
    biases = b_ref[...]
    b0 = biases[0:1, :]
    b1 = biases[1:2, :]
    bfc1 = biases[2:3, :]
    bfc2 = biases[3:4, :]

    # Hoisted layer-0 input projection + bias: one MXU op for all time steps.
    xp0 = (jnp.dot(x_ref[0:T * BP, :], w_ref[_W_IH0:_W_HH0, :],
                   preferred_element_type=jnp.float32) + b0)       # (T*BP, 4H)

    whh0 = w_ref[_W_HH0:_W_L1, :]      # (H, 4H)
    w1 = w_ref[_W_L1:_W_FC1, :]        # (2H, 4H)  == [wih1; whh1]

    # Per-gate pre/post scale so a SINGLE tanh covers i/f/o (via
    # sigmoid(x) = 0.5*tanh(x/2) + 0.5) and g (plain tanh).  Gate order [i,f,g,o].
    lane = lax.broadcasted_iota(jnp.int32, (1, 4 * H), 1)
    g_grp = (lane >= 2 * H) & (lane < 3 * H)
    pre = jnp.where(g_grp, 1.0, 0.5).astype(jnp.float32)
    post_m = jnp.where(g_grp, 1.0, 0.5).astype(jnp.float32)
    post_a = jnp.where(g_grp, 0.0, 0.5).astype(jnp.float32)

    def cell(gates, c):
        # one EUP push (tanh over the full 128-lane gate vreg) for all 4 gates
        t = post_m * jnp.tanh(pre * gates) + post_a
        i_g = t[:, 0 * H:1 * H]
        f_g = t[:, 1 * H:2 * H]
        g_g = t[:, 2 * H:3 * H]
        o_g = t[:, 3 * H:4 * H]
        c_new = f_g * c + i_g * g_g
        h_new = o_g * jnp.tanh(c_new)
        return h_new, c_new

    zeros = jnp.zeros((BP, H), jnp.float32)
    h0, c0 = zeros, zeros
    h1, c1 = zeros, zeros

    # Wavefront: layer-1 step t follows layer-0 step t in program order, so the
    # scheduler can overlap h1[t] with h0[t+1]; dep chain ~ (T+1) cells.
    for t in range(T):  # static unroll (T=8): one basic block, LLO interleaves
        g0 = (xp0[t * BP:(t + 1) * BP, :]
              + jnp.dot(h0, whh0, preferred_element_type=jnp.float32))
        h0, c0 = cell(g0, c0)
        # fused layer-1 input+recurrent matmul: [h0_t | h1_{t-1}] @ [wih1; whh1]
        lhs1 = jnp.concatenate([h0, h1], axis=1)                    # (BP, 2H)
        g1 = jnp.dot(lhs1, w1, preferred_element_type=jnp.float32) + b1
        h1, c1 = cell(g1, c1)

    # TODO(synk): nn.LSTM inter-layer dropout and nn.Dropout are train-only; identity in eval.

    # Head: fc1 -> relu -> fc2 on last h of layer 1.  fc2 weights are padded to
    # a (128,128) tile (real column 0) so the output store is lane-dense.
    z = jnp.maximum(
        jnp.dot(h1, w_ref[_W_FC1:_W_FC2, :], preferred_element_type=jnp.float32)
        + bfc1, 0.0)
    out_ref[...] = (jnp.dot(z, w_ref[_W_FC2:_W_END, :],
                            preferred_element_type=jnp.float32) + bfc2)


# ------------------------------- wrapper -------------------------------------
@jax.jit
def lstm_model_forward(x, w_packed, b_packed):
    """x: (B, T, D) float32 -> (B, 1) float32"""
    # time-major, pad batch to a full sublane tile, flatten (T, BP) -> rows
    x_tm = jnp.transpose(x, (1, 0, 2))                      # (T, B, D)
    x_pad = jnp.pad(x_tm, ((0, 0), (0, BP - B), (0, 0)))    # (T, BP, D)
    x2d = x_pad.reshape(T * BP, D)

    out = pl.pallas_call(
        lstm_kernel,
        out_shape=jax.ShapeDtypeStruct((BP, 4 * H), jnp.float32),
        # no grid: single invocation, everything resident in VMEM (<1 MiB)
    )(x2d, w_packed, b_packed)

    return out[:B, :FC2]


# ------------------------- deterministic parameters --------------------------
def init_params(key):
    """Weights stored pre-transposed: x @ W (W is (in, out))."""
    bound = 1.0 / np.sqrt(H)  # PyTorch LSTM/Linear-style uniform bound (approx.)
    ks = jax.random.split(key, 12)
    u = lambda k, shape: jax.random.uniform(k, shape, jnp.float32, -bound, bound)
    return {
        # layer 0
        "wih0": u(ks[0], (D, 4 * H)),
        "whh0": u(ks[1], (H, 4 * H)),
        "b0":   u(ks[2], (1, 4 * H)) + u(ks[3], (1, 4 * H)),  # b_ih + b_hh
        # layer 1
        "wih1": u(ks[4], (H, 4 * H)),
        "whh1": u(ks[5], (H, 4 * H)),
        "b1":   u(ks[6], (1, 4 * H)) + u(ks[7], (1, 4 * H)),
        # head
        "wfc1": u(ks[8], (H, FC1)),
        "bfc1": u(ks[9], (1, FC1)),
        "wfc2": u(ks[10], (FC1, FC2)),
        "bfc2": u(ks[11], (1, FC2)),
    }


def pack_params(p):
    """One-time packing/padding (kept OUT of the per-call jit wrapper)."""
    wfc1_p = jnp.pad(p["wfc1"], ((0, 0), (0, FC1_P - FC1)))          # (H, 128)
    bfc1_p = jnp.pad(p["bfc1"], ((0, 0), (0, FC1_P - FC1)))          # (1, 128)
    wfc2_p = jnp.pad(p["wfc2"], ((0, FC1_P - FC1), (0, 4 * H - FC2)))  # (128, 128)
    bfc2_p = jnp.pad(p["bfc2"], ((0, 0), (0, 4 * H - FC2)))          # (1, 128)
    w_packed = jnp.concatenate(
        [p["wih0"], p["whh0"], p["wih1"], p["whh1"], wfc1_p, wfc2_p], axis=0)
    b_packed = jnp.concatenate([p["b0"], p["b1"], bfc1_p, bfc2_p], axis=0)
    assert w_packed.shape == (_W_END, 4 * H)
    assert b_packed.shape == (4, 4 * H)
    return w_packed, b_packed


# ----------------------------- pure-JAX reference ----------------------------
def lstm_model_ref(x, p):
    def cell(x_t, h, c, wih, whh, b):
        gates = x_t @ wih + h @ whh + b
        i_g = jax.nn.sigmoid(gates[:, 0 * H:1 * H])
        f_g = jax.nn.sigmoid(gates[:, 1 * H:2 * H])
        g_g = jnp.tanh(gates[:, 2 * H:3 * H])
        o_g = jax.nn.sigmoid(gates[:, 3 * H:4 * H])
        c_new = f_g * c + i_g * g_g
        h_new = o_g * jnp.tanh(c_new)
        return h_new, c_new

    def step(carry, x_t):
        h0, c0, h1, c1 = carry
        h0, c0 = cell(x_t, h0, c0, p["wih0"], p["whh0"], p["b0"])
        h1, c1 = cell(h0, h1, c1, p["wih1"], p["whh1"], p["b1"])
        return (h0, c0, h1, c1), h1

    z = jnp.zeros((B, H), jnp.float32)
    (_, _, h1, _), _ = lax.scan(step, (z, z, z, z), jnp.transpose(x, (1, 0, 2)))
    out = jnp.maximum(h1 @ p["wfc1"] + p["bfc1"], 0.0)
    return out @ p["wfc2"] + p["bfc2"]


# ---------------------------------- main -------------------------------------
if __name__ == "__main__":
    key = jax.random.PRNGKey(0)
    k_x, k_p = jax.random.split(key)
    x = jax.random.normal(k_x, (B, T, D), jnp.float32)
    params = init_params(k_p)
    w_packed, b_packed = pack_params(params)   # constant packing, done once

    out = jax.block_until_ready(lstm_model_forward(x, w_packed, b_packed))
    ref = jax.block_until_ready(lstm_model_ref(x, params))

    assert out.shape == (B, 1), out.shape
    np.testing.assert_allclose(np.asarray(out), np.asarray(ref), rtol=1e-3, atol=1e-3)
    print("KERNEL_OK")
</pallas_src>

<mosaic_0001>
module attributes {stable_mosaic.version = 11 : i64} {
  func.func @lstm_kernel(%arg0: memref<64x16xf32, #tpu.memory_space<vmem>>, %arg1: memref<272x128xf32, #tpu.memory_space<vmem>>, %arg2: memref<4x128xf32, #tpu.memory_space<vmem>>, %arg3: memref<8x128xf32, #tpu.memory_space<vmem>>) attributes {dimension_semantics = [], scalar_prefetch = 0 : i64, scratch_operands = 0 : i64, tpu.core_type = #tpu.core_type<tc>} {
    %c0 = arith.constant 0 : index
    %c0_0 = arith.constant 0 : index
    %0 = vector.load %arg2[%c0, %c0_0] : memref<4x128xf32, #tpu.memory_space<vmem>>, vector<4x128xf32>
    %1 = vector.extract_strided_slice %0 {offsets = [0, 0], sizes = [1, 128], strides = [1, 1]} : vector<4x128xf32> to vector<1x128xf32>
    %2 = vector.extract_strided_slice %0 {offsets = [1, 0], sizes = [1, 128], strides = [1, 1]} : vector<4x128xf32> to vector<1x128xf32>
    %3 = vector.extract_strided_slice %0 {offsets = [2, 0], sizes = [1, 128], strides = [1, 1]} : vector<4x128xf32> to vector<1x128xf32>
    %4 = vector.extract_strided_slice %0 {offsets = [3, 0], sizes = [1, 128], strides = [1, 1]} : vector<4x128xf32> to vector<1x128xf32>
    %c0_1 = arith.constant 0 : index
    %c0_2 = arith.constant 0 : index
    %5 = vector.load %arg0[%c0_1, %c0_2] : memref<64x16xf32, #tpu.memory_space<vmem>>, vector<64x16xf32>
    %c0_3 = arith.constant 0 : index
    %c0_4 = arith.constant 0 : index
    %6 = vector.load %arg1[%c0_3, %c0_4] : memref<272x128xf32, #tpu.memory_space<vmem>>, vector<16x128xf32>
    %cst = arith.constant dense<0.000000e+00> : vector<64x128xf32>
    %7 = tpu.matmul %5, %6, %cst {dimension_numbers = #tpu.dot_dimension_numbers<[1], [0], [0], [1], [0, 0, 1, 1], [], []>} : vector<64x16xf32>, vector<16x128xf32>, vector<64x128xf32> -> vector<64x128xf32>
    %8 = vector.broadcast %1 : vector<1x128xf32> to vector<64x128xf32>
    %9 = arith.addf %7, %8 : vector<64x128xf32>
    %c16 = arith.constant 16 : index
    %c0_5 = arith.constant 0 : index
    %10 = vector.load %arg1[%c16, %c0_5] : memref<272x128xf32, #tpu.memory_space<vmem>>, vector<32x128xf32>
    %c48 = arith.constant 48 : index
    %c0_6 = arith.constant 0 : index
    %11 = vector.load %arg1[%c48, %c0_6] : memref<272x128xf32, #tpu.memory_space<vmem>>, vector<64x128xf32>
    %12 = tpu.iota {dimensions = array<i32: 1>} : vector<1x128xi32>
    %c64_i32 = arith.constant 64 : i32
    %13 = vector.broadcast %c64_i32 : i32 to vector<1x128xi32>
    %14 = arith.cmpi sge, %12, %13 : vector<1x128xi32>
    %c96_i32 = arith.constant 96 : i32
    %15 = vector.broadcast %c96_i32 : i32 to vector<1x128xi32>
    %16 = arith.cmpi slt, %12, %15 : vector<1x128xi32>
    %17 = arith.andi %14, %16 : vector<1x128xi1>
    %cst_7 = arith.constant 1.000000e+00 : f32
    %cst_8 = arith.constant 5.000000e-01 : f32
    %18 = vector.broadcast %cst_7 : f32 to vector<1x128xf32>
    %19 = vector.broadcast %cst_8 : f32 to vector<1x128xf32>
    %20 = arith.select %17, %18, %19 : vector<1x128xi1>, vector<1x128xf32>
    %cst_9 = arith.constant 1.000000e+00 : f32
    %cst_10 = arith.constant 5.000000e-01 : f32
    %21 = vector.broadcast %cst_9 : f32 to vector<1x128xf32>
    %22 = vector.broadcast %cst_10 : f32 to vector<1x128xf32>
    %23 = arith.select %17, %21, %22 : vector<1x128xi1>, vector<1x128xf32>
    %cst_11 = arith.constant 0.000000e+00 : f32
    %cst_12 = arith.constant 5.000000e-01 : f32
    %24 = vector.broadcast %cst_11 : f32 to vector<1x128xf32>
    %25 = vector.broadcast %cst_12 : f32 to vector<1x128xf32>
    %26 = arith.select %17, %24, %25 : vector<1x128xi1>, vector<1x128xf32>
    %cst_13 = arith.constant 0.000000e+00 : f32
    %27 = vector.broadcast %cst_13 : f32 to vector<8x32xf32>
    %28 = vector.extract_strided_slice %9 {offsets = [0, 0], sizes = [8, 128], strides = [1, 1]} : vector<64x128xf32> to vector<8x128xf32>
    %cst_14 = arith.constant dense<0.000000e+00> : vector<8x128xf32>
    %29 = tpu.matmul %27, %10, %cst_14 {dimension_numbers = #tpu.dot_dimension_numbers<[1], [0], [0], [1], [0, 0, 1, 1], [], []>} : vector<8x32xf32>, vector<32x128xf32>, vector<8x128xf32> -> vector<8x128xf32>
    %30 = arith.addf %28, %29 : vector<8x128xf32>
    %31 = vector.broadcast %20 : vector<1x128xf32> to vector<8x128xf32>
    %32 = arith.mulf %31, %30 : vector<8x128xf32>
    %33 = math.tanh %32 : vector<8x128xf32>
    %34 = vector.broadcast %23 : vector<1x128xf32> to vector<8x128xf32>
    %35 = arith.mulf %34, %33 : vector<8x128xf32>
    %36 = vector.broadcast %26 : vector<1x128xf32> to vector<8x128xf32>
    %37 = arith.addf %35, %36 : vector<8x128xf32>
    %38 = vector.extract_strided_slice %37 {offsets = [0, 0], sizes = [8, 32], strides = [1, 1]} : vector<8x128xf32> to vector<8x32xf32>
    %39 = vector.extract_strided_slice %37 {offsets = [0, 32], sizes = [8, 32], strides = [1, 1]} : vector<8x128xf32> to vector<8x32xf32>
    %40 = vector.extract_strided_slice %37 {offsets = [0, 64], sizes = [8, 32], strides = [1, 1]} : vector<8x128xf32> to vector<8x32xf32>
    %41 = vector.extract_strided_slice %37 {offsets = [0, 96], sizes = [8, 32], strides = [1, 1]} : vector<8x128xf32> to vector<8x32xf32>
    %42 = arith.mulf %39, %27 : vector<8x32xf32>
    %43 = arith.mulf %38, %40 : vector<8x32xf32>
    %44 = arith.addf %42, %43 : vector<8x32xf32>
    %45 = math.tanh %44 : vector<8x32xf32>
    %46 = arith.mulf %41, %45 : vector<8x32xf32>
    %47 = tpu.concatenate %46, %27 in 1 : vector<8x32xf32>, vector<8x32xf32> -> vector<8x64xf32>
    %cst_15 = arith.constant dense<0.000000e+00> : vector<8x128xf32>
    %48 = tpu.matmul %47, %11, %cst_15 {dimension_numbers = #tpu.dot_dimension_numbers<[1], [0], [0], [1], [0, 0, 1, 1], [], []>} : vector<8x64xf32>, vector<64x128xf32>, vector<8x128xf32> -> vector<8x128xf32>
    %49 = vector.broadcast %2 : vector<1x128xf32> to vector<8x128xf32>
    %50 = arith.addf %48, %49 : vector<8x128xf32>
    %51 = vector.broadcast %20 : vector<1x128xf32> to vector<8x128xf32>
    %52 = arith.mulf %51, %50 : vector<8x128xf32>
    %53 = math.tanh %52 : vector<8x128xf32>
    %54 = vector.broadcast %23 : vector<1x128xf32> to vector<8x128xf32>
    %55 = arith.mulf %54, %53 : vector<8x128xf32>
    %56 = vector.broadcast %26 : vector<1x128xf32> to vector<8x128xf32>
    %57 = arith.addf %55, %56 : vector<8x128xf32>
    %58 = vector.extract_strided_slice %57 {offsets = [0, 0], sizes = [8, 32], strides = [1, 1]} : vector<8x128xf32> to vector<8x32xf32>
    %59 = vector.extract_strided_slice %57 {offsets = [0, 32], sizes = [8, 32], strides = [1, 1]} : vector<8x128xf32> to vector<8x32xf32>
    %60 = vector.extract_strided_slice %57 {offsets = [0, 64], sizes = [8, 32], strides = [1, 1]} : vector<8x128xf32> to vector<8x32xf32>
    %61 = vector.extract_strided_slice %57 {offsets = [0, 96], sizes = [8, 32], strides = [1, 1]} : vector<8x128xf32> to vector<8x32xf32>
    %62 = arith.mulf %59, %27 : vector<8x32xf32>
    %63 = arith.mulf %58, %60 : vector<8x32xf32>
    %64 = arith.addf %62, %63 : vector<8x32xf32>
    %65 = math.tanh %64 : vector<8x32xf32>
    %66 = arith.mulf %61, %65 : vector<8x32xf32>
    %67 = vector.extract_strided_slice %9 {offsets = [8, 0], sizes = [8, 128], strides = [1, 1]} : vector<64x128xf32> to vector<8x128xf32>
    %cst_16 = arith.constant dense<0.000000e+00> : vector<8x128xf32>
    %68 = tpu.matmul %46, %10, %cst_16 {dimension_numbers = #tpu.dot_dimension_numbers<[1], [0], [0], [1], [0, 0, 1, 1], [], []>} : vector<8x32xf32>, vector<32x128xf32>, vector<8x128xf32> -> vector<8x128xf32>
    %69 = arith.addf %67, %68 : vector<8x128xf32>
    %70 = vector.broadcast %20 : vector<1x128xf32> to vector<8x128xf32>
    %71 = arith.mulf %70, %69 : vector<8x128xf32>
    %72 = math.tanh %71 : vector<8x128xf32>
    %73 = vector.broadcast %23 : vector<1x128xf32> to vector<8x128xf32>
    %74 = arith.mulf %73, %72 : vector<8x128xf32>
    %75 = vector.broadcast %26 : vector<1x128xf32> to vector<8x128xf32>
    %76 = arith.addf %74, %75 : vector<8x128xf32>
    %77 = vector.extract_strided_slice %76 {offsets = [0, 0], sizes = [8, 32], strides = [1, 1]} : vector<8x128xf32> to vector<8x32xf32>
    %78 = vector.extract_strided_slice %76 {offsets = [0, 32], sizes = [8, 32], strides = [1, 1]} : vector<8x128xf32> to vector<8x32xf32>
    %79 = vector.extract_strided_slice %76 {offsets = [0, 64], sizes = [8, 32], strides = [1, 1]} : vector<8x128xf32> to vector<8x32xf32>
    %80 = vector.extract_strided_slice %76 {offsets = [0, 96], sizes = [8, 32], strides = [1, 1]} : vector<8x128xf32> to vector<8x32xf32>
    %81 = arith.mulf %78, %44 : vector<8x32xf32>
    %82 = arith.mulf %77, %79 : vector<8x32xf32>
    %83 = arith.addf %81, %82 : vector<8x32xf32>
    %84 = math.tanh %83 : vector<8x32xf32>
    %85 = arith.mulf %80, %84 : vector<8x32xf32>
    %86 = tpu.concatenate %85, %66 in 1 : vector<8x32xf32>, vector<8x32xf32> -> vector<8x64xf32>
    %cst_17 = arith.constant dense<0.000000e+00> : vector<8x128xf32>
    %87 = tpu.matmul %86, %11, %cst_17 {dimension_numbers = #tpu.dot_dimension_numbers<[1], [0], [0], [1], [0, 0, 1, 1], [], []>} : vector<8x64xf32>, vector<64x128xf32>, vector<8x128xf32> -> vector<8x128xf32>
    %88 = vector.broadcast %2 : vector<1x128xf32> to vector<8x128xf32>
    %89 = arith.addf %87, %88 : vector<8x128xf32>
    %90 = vector.broadcast %20 : vector<1x128xf32> to vector<8x128xf32>
    %91 = arith.mulf %90, %89 : vector<8x128xf32>
    %92 = math.tanh %91 : vector<8x128xf32>
    %93 = vector.broadcast %23 : vector<1x128xf32> to vector<8x128xf32>
    %94 = arith.mulf %93, %92 : vector<8x128xf32>
    %95 = vector.broadcast %26 : vector<1x128xf32> to vector<8x128xf32>
    %96 = arith.addf %94, %95 : vector<8x128xf32>
    %97 = vector.extract_strided_slice %96 {offsets = [0, 0], sizes = [8, 32], strides = [1, 1]} : vector<8x128xf32> to vector<8x32xf32>
    %98 = vector.extract_strided_slice %96 {offsets = [0, 32], sizes = [8, 32], strides = [1, 1]} : vector<8x128xf32> to vector<8x32xf32>
    %99 = vector.extract_strided_slice %96 {offsets = [0, 64], sizes = [8, 32], strides = [1, 1]} : vector<8x128xf32> to vector<8x32xf32>
    %100 = vector.extract_strided_slice %96 {offsets = [0, 96], sizes = [8, 32], strides = [1, 1]} : vector<8x128xf32> to vector<8x32xf32>
    %101 = arith.mulf %98, %64 : vector<8x32xf32>
    %102 = arith.mulf %97, %99 : vector<8x32xf32>
    %103 = arith.addf %101, %102 : vector<8x32xf32>
    %104 = math.tanh %103 : vector<8x32xf32>
    %105 = arith.mulf %100, %104 : vector<8x32xf32>
    %106 = vector.extract_strided_slice %9 {offsets = [16, 0], sizes = [8, 128], strides = [1, 1]} : vector<64x128xf32> to vector<8x128xf32>
    %cst_18 = arith.constant dense<0.000000e+00> : vector<8x128xf32>
    %107 = tpu.matmul %85, %10, %cst_18 {dimension_numbers = #tpu.dot_dimension_numbers<[1], [0], [0], [1], [0, 0, 1, 1], [], []>} : vector<8x32xf32>, vector<32x128xf32>, vector<8x128xf32> -> vector<8x128xf32>
    %108 = arith.addf %106, %107 : vector<8x128xf32>
    %109 = vector.broadcast %20 : vector<1x128xf32> to vector<8x128xf32>
    %110 = arith.mulf %109, %108 : vector<8x128xf32>
    %111 = math.tanh %110 : vector<8x128xf32>
    %112 = vector.broadcast %23 : vector<1x128xf32> to vector<8x128xf32>
    %113 = arith.mulf %112, %111 : vector<8x128xf32>
    %114 = vector.broadcast %26 : vector<1x128xf32> to vector<8x128xf32>
    %115 = arith.addf %113, %114 : vector<8x128xf32>
    %116 = vector.extract_strided_slice %115 {offsets = [0, 0], sizes = [8, 32], strides = [1, 1]} : vector<8x128xf32> to vector<8x32xf32>
    %117 = vector.extract_strided_slice %115 {offsets = [0, 32], sizes = [8, 32], strides = [1, 1]} : vector<8x128xf32> to vector<8x32xf32>
    %118 = vector.extract_strided_slice %115 {offsets = [0, 64], sizes = [8, 32], strides = [1, 1]} : vector<8x128xf32> to vector<8x32xf32>
    %119 = vector.extract_strided_slice %115 {offsets = [0, 96], sizes = [8, 32], strides = [1, 1]} : vector<8x128xf32> to vector<8x32xf32>
    %120 = arith.mulf %117, %83 : vector<8x32xf32>
    %121 = arith.mulf %116, %118 : vector<8x32xf32>
    %122 = arith.addf %120, %121 : vector<8x32xf32>
    %123 = math.tanh %122 : vector<8x32xf32>
    %124 = arith.mulf %119, %123 : vector<8x32xf32>
    %125 = tpu.concatenate %124, %105 in 1 : vector<8x32xf32>, vector<8x32xf32> -> vector<8x64xf32>
    %cst_19 = arith.constant dense<0.000000e+00> : vector<8x128xf32>
    %126 = tpu.matmul %125, %11, %cst_19 {dimension_numbers = #tpu.dot_dimension_numbers<[1], [0], [0], [1], [0, 0, 1, 1], [], []>} : vector<8x64xf32>, vector<64x128xf32>, vector<8x128xf32> -> vector<8x128xf32>
    %127 = vector.broadcast %2 : vector<1x128xf32> to vector<8x128xf32>
    %128 = arith.addf %126, %127 : vector<8x128xf32>
    %129 = vector.broadcast %20 : vector<1x128xf32> to vector<8x128xf32>
    %130 = arith.mulf %129, %128 : vector<8x128xf32>
    %131 = math.tanh %130 : vector<8x128xf32>
    %132 = vector.broadcast %23 : vector<1x128xf32> to vector<8x128xf32>
    %133 = arith.mulf %132, %131 : vector<8x128xf32>
    %134 = vector.broadcast %26 : vector<1x128xf32> to vector<8x128xf32>
    %135 = arith.addf %133, %134 : vector<8x128xf32>
    %136 = vector.extract_strided_slice %135 {offsets = [0, 0], sizes = [8, 32], strides = [1, 1]} : vector<8x128xf32> to vector<8x32xf32>
    %137 = vector.extract_strided_slice %135 {offsets = [0, 32], sizes = [8, 32], strides = [1, 1]} : vector<8x128xf32> to vector<8x32xf32>
    %138 = vector.extract_strided_slice %135 {offsets = [0, 64], sizes = [8, 32], strides = [1, 1]} : vector<8x128xf32> to vector<8x32xf32>
    %139 = vector.extract_strided_slice %135 {offsets = [0, 96], sizes = [8, 32], strides = [1, 1]} : vector<8x128xf32> to vector<8x32xf32>
    %140 = arith.mulf %137, %103 : vector<8x32xf32>
    %141 = arith.mulf %136, %138 : vector<8x32xf32>
    %142 = arith.addf %140, %141 : vector<8x32xf32>
    %143 = math.tanh %142 : vector<8x32xf32>
    %144 = arith.mulf %139, %143 : vector<8x32xf32>
    %145 = vector.extract_strided_slice %9 {offsets = [24, 0], sizes = [8, 128], strides = [1, 1]} : vector<64x128xf32> to vector<8x128xf32>
    %cst_20 = arith.constant dense<0.000000e+00> : vector<8x128xf32>
    %146 = tpu.matmul %124, %10, %cst_20 {dimension_numbers = #tpu.dot_dimension_numbers<[1], [0], [0], [1], [0, 0, 1, 1], [], []>} : vector<8x32xf32>, vector<32x128xf32>, vector<8x128xf32> -> vector<8x128xf32>
    %147 = arith.addf %145, %146 : vector<8x128xf32>
    %148 = vector.broadcast %20 : vector<1x128xf32> to vector<8x128xf32>
    %149 = arith.mulf %148, %147 : vector<8x128xf32>
    %150 = math.tanh %149 : vector<8x128xf32>
    %151 = vector.broadcast %23 : vector<1x128xf32> to vector<8x128xf32>
    %152 = arith.mulf %151, %150 : vector<8x128xf32>
    %153 = vector.broadcast %26 : vector<1x128xf32> to vector<8x128xf32>
    %154 = arith.addf %152, %153 : vector<8x128xf32>
    %155 = vector.extract_strided_slice %154 {offsets = [0, 0], sizes = [8, 32], strides = [1, 1]} : vector<8x128xf32> to vector<8x32xf32>
    %156 = vector.extract_strided_slice %154 {offsets = [0, 32], sizes = [8, 32], strides = [1, 1]} : vector<8x128xf32> to vector<8x32xf32>
    %157 = vector.extract_strided_slice %154 {offsets = [0, 64], sizes = [8, 32], strides = [1, 1]} : vector<8x128xf32> to vector<8x32xf32>
    %158 = vector.extract_strided_slice %154 {offsets = [0, 96], sizes = [8, 32], strides = [1, 1]} : vector<8x128xf32> to vector<8x32xf32>
    %159 = arith.mulf %156, %122 : vector<8x32xf32>
    %160 = arith.mulf %155, %157 : vector<8x32xf32>
    %161 = arith.addf %159, %160 : vector<8x32xf32>
    %162 = math.tanh %161 : vector<8x32xf32>
    %163 = arith.mulf %158, %162 : vector<8x32xf32>
    %164 = tpu.concatenate %163, %144 in 1 : vector<8x32xf32>, vector<8x32xf32> -> vector<8x64xf32>
    %cst_21 = arith.constant dense<0.000000e+00> : vector<8x128xf32>
    %165 = tpu.matmul %164, %11, %cst_21 {dimension_numbers = #tpu.dot_dimension_numbers<[1], [0], [0], [1], [0, 0, 1, 1], [], []>} : vector<8x64xf32>, vector<64x128xf32>, vector<8x128xf32> -> vector<8x128xf32>
    %166 = vector.broadcast %2 : vector<1x128xf32> to vector<8x128xf32>
    %167 = arith.addf %165, %166 : vector<8x128xf32>
    %168 = vector.broadcast %20 : vector<1x128xf32> to vector<8x128xf32>
    %169 = arith.mulf %168, %167 : vector<8x128xf32>
    %170 = math.tanh %169 : vector<8x128xf32>
    %171 = vector.broadcast %23 : vector<1x128xf32> to vector<8x128xf32>
    %172 = arith.mulf %171, %170 : vector<8x128xf32>
    %173 = vector.broadcast %26 : vector<1x128xf32> to vector<8x128xf32>
    %174 = arith.addf %172, %173 : vector<8x128xf32>
    %175 = vector.extract_strided_slice %174 {offsets = [0, 0], sizes = [8, 32], strides = [1, 1]} : vector<8x128xf32> to vector<8x32xf32>
    %176 = vector.extract_strided_slice %174 {offsets = [0, 32], sizes = [8, 32], strides = [1, 1]} : vector<8x128xf32> to vector<8x32xf32>
    %177 = vector.extract_strided_slice %174 {offsets = [0, 64], sizes = [8, 32], strides = [1, 1]} : vector<8x128xf32> to vector<8x32xf32>
    %178 = vector.extract_strided_slice %174 {offsets = [0, 96], sizes = [8, 32], strides = [1, 1]} : vector<8x128xf32> to vector<8x32xf32>
    %179 = arith.mulf %176, %142 : vector<8x32xf32>
    %180 = arith.mulf %175, %177 : vector<8x32xf32>
    %181 = arith.addf %179, %180 : vector<8x32xf32>
    %182 = math.tanh %181 : vector<8x32xf32>
    %183 = arith.mulf %178, %182 : vector<8x32xf32>
    %184 = vector.extract_strided_slice %9 {offsets = [32, 0], sizes = [8, 128], strides = [1, 1]} : vector<64x128xf32> to vector<8x128xf32>
    %cst_22 = arith.constant dense<0.000000e+00> : vector<8x128xf32>
    %185 = tpu.matmul %163, %10, %cst_22 {dimension_numbers = #tpu.dot_dimension_numbers<[1], [0], [0], [1], [0, 0, 1, 1], [], []>} : vector<8x32xf32>, vector<32x128xf32>, vector<8x128xf32> -> vector<8x128xf32>
    %186 = arith.addf %184, %185 : vector<8x128xf32>
    %187 = vector.broadcast %20 : vector<1x128xf32> to vector<8x128xf32>
    %188 = arith.mulf %187, %186 : vector<8x128xf32>
    %189 = math.tanh %188 : vector<8x128xf32>
    %190 = vector.broadcast %23 : vector<1x128xf32> to vector<8x128xf32>
    %191 = arith.mulf %190, %189 : vector<8x128xf32>
    %192 = vector.broadcast %26 : vector<1x128xf32> to vector<8x128xf32>
    %193 = arith.addf %191, %192 : vector<8x128xf32>
    %194 = vector.extract_strided_slice %193 {offsets = [0, 0], sizes = [8, 32], strides = [1, 1]} : vector<8x128xf32> to vector<8x32xf32>
    %195 = vector.extract_strided_slice %193 {offsets = [0, 32], sizes = [8, 32], strides = [1, 1]} : vector<8x128xf32> to vector<8x32xf32>
    %196 = vector.extract_strided_slice %193 {offsets = [0, 64], sizes = [8, 32], strides = [1, 1]} : vector<8x128xf32> to vector<8x32xf32>
    %197 = vector.extract_strided_slice %193 {offsets = [0, 96], sizes = [8, 32], strides = [1, 1]} : vector<8x128xf32> to vector<8x32xf32>
    %198 = arith.mulf %195, %161 : vector<8x32xf32>
    %199 = arith.mulf %194, %196 : vector<8x32xf32>
    %200 = arith.addf %198, %199 : vector<8x32xf32>
    %201 = math.tanh %200 : vector<8x32xf32>
    %202 = arith.mulf %197, %201 : vector<8x32xf32>
    %203 = tpu.concatenate %202, %183 in 1 : vector<8x32xf32>, vector<8x32xf32> -> vector<8x64xf32>
    %cst_23 = arith.constant dense<0.000000e+00> : vector<8x128xf32>
    %204 = tpu.matmul %203, %11, %cst_23 {dimension_numbers = #tpu.dot_dimension_numbers<[1], [0], [0], [1], [0, 0, 1, 1], [], []>} : vector<8x64xf32>, vector<64x128xf32>, vector<8x128xf32> -> vector<8x128xf32>
    %205 = vector.broadcast %2 : vector<1x128xf32> to vector<8x128xf32>
    %206 = arith.addf %204, %205 : vector<8x128xf32>
    %207 = vector.broadcast %20 : vector<1x128xf32> to vector<8x128xf32>
    %208 = arith.mulf %207, %206 : vector<8x128xf32>
    %209 = math.tanh %208 : vector<8x128xf32>
    %210 = vector.broadcast %23 : vector<1x128xf32> to vector<8x128xf32>
    %211 = arith.mulf %210, %209 : vector<8x128xf32>
    %212 = vector.broadcast %26 : vector<1x128xf32> to vector<8x128xf32>
    %213 = arith.addf %211, %212 : vector<8x128xf32>
    %214 = vector.extract_strided_slice %213 {offsets = [0, 0], sizes = [8, 32], strides = [1, 1]} : vector<8x128xf32> to vector<8x32xf32>
    %215 = vector.extract_strided_slice %213 {offsets = [0, 32], sizes = [8, 32], strides = [1, 1]} : vector<8x128xf32> to vector<8x32xf32>
    %216 = vector.extract_strided_slice %213 {offsets = [0, 64], sizes = [8, 32], strides = [1, 1]} : vector<8x128xf32> to vector<8x32xf32>
    %217 = vector.extract_strided_slice %213 {offsets = [0, 96], sizes = [8, 32], strides = [1, 1]} : vector<8x128xf32> to vector<8x32xf32>
    %218 = arith.mulf %215, %181 : vector<8x32xf32>
    %219 = arith.mulf %214, %216 : vector<8x32xf32>
    %220 = arith.addf %218, %219 : vector<8x32xf32>
    %221 = math.tanh %220 : vector<8x32xf32>
    %222 = arith.mulf %217, %221 : vector<8x32xf32>
    %223 = vector.extract_strided_slice %9 {offsets = [40, 0], sizes = [8, 128], strides = [1, 1]} : vector<64x128xf32> to vector<8x128xf32>
    %cst_24 = arith.constant dense<0.000000e+00> : vector<8x128xf32>
    %224 = tpu.matmul %202, %10, %cst_24 {dimension_numbers = #tpu.dot_dimension_numbers<[1], [0], [0], [1], [0, 0, 1, 1], [], []>} : vector<8x32xf32>, vector<32x128xf32>, vector<8x128xf32> -> vector<8x128xf32>
    %225 = arith.addf %223, %224 : vector<8x128xf32>
    %226 = vector.broadcast %20 : vector<1x128xf32> to vector<8x128xf32>
    %227 = arith.mulf %226, %225 : vector<8x128xf32>
    %228 = math.tanh %227 : vector<8x128xf32>
    %229 = vector.broadcast %23 : vector<1x128xf32> to vector<8x128xf32>
    %230 = arith.mulf %229, %228 : vector<8x128xf32>
    %231 = vector.broadcast %26 : vector<1x128xf32> to vector<8x128xf32>
    %232 = arith.addf %230, %231 : vector<8x128xf32>
    %233 = vector.extract_strided_slice %232 {offsets = [0, 0], sizes = [8, 32], strides = [1, 1]} : vector<8x128xf32> to vector<8x32xf32>
    %234 = vector.extract_strided_slice %232 {offsets = [0, 32], sizes = [8, 32], strides = [1, 1]} : vector<8x128xf32> to vector<8x32xf32>
    %235 = vector.extract_strided_slice %232 {offsets = [0, 64], sizes = [8, 32], strides = [1, 1]} : vector<8x128xf32> to vector<8x32xf32>
    %236 = vector.extract_strided_slice %232 {offsets = [0, 96], sizes = [8, 32], strides = [1, 1]} : vector<8x128xf32> to vector<8x32xf32>
    %237 = arith.mulf %234, %200 : vector<8x32xf32>
    %238 = arith.mulf %233, %235 : vector<8x32xf32>
    %239 = arith.addf %237, %238 : vector<8x32xf32>
    %240 = math.tanh %239 : vector<8x32xf32>
    %241 = arith.mulf %236, %240 : vector<8x32xf32>
    %242 = tpu.concatenate %241, %222 in 1 : vector<8x32xf32>, vector<8x32xf32> -> vector<8x64xf32>
    %cst_25 = arith.constant dense<0.000000e+00> : vector<8x128xf32>
    %243 = tpu.matmul %242, %11, %cst_25 {dimension_numbers = #tpu.dot_dimension_numbers<[1], [0], [0], [1], [0, 0, 1, 1], [], []>} : vector<8x64xf32>, vector<64x128xf32>, vector<8x128xf32> -> vector<8x128xf32>
    %244 = vector.broadcast %2 : vector<1x128xf32> to vector<8x128xf32>
    %245 = arith.addf %243, %244 : vector<8x128xf32>
    %246 = vector.broadcast %20 : vector<1x128xf32> to vector<8x128xf32>
    %247 = arith.mulf %246, %245 : vector<8x128xf32>
    %248 = math.tanh %247 : vector<8x128xf32>
    %249 = vector.broadcast %23 : vector<1x128xf32> to vector<8x128xf32>
    %250 = arith.mulf %249, %248 : vector<8x128xf32>
    %251 = vector.broadcast %26 : vector<1x128xf32> to vector<8x128xf32>
    %252 = arith.addf %250, %251 : vector<8x128xf32>
    %253 = vector.extract_strided_slice %252 {offsets = [0, 0], sizes = [8, 32], strides = [1, 1]} : vector<8x128xf32> to vector<8x32xf32>
    %254 = vector.extract_strided_slice %252 {offsets = [0, 32], sizes = [8, 32], strides = [1, 1]} : vector<8x128xf32> to vector<8x32xf32>
    %255 = vector.extract_strided_slice %252 {offsets = [0, 64], sizes = [8, 32], strides = [1, 1]} : vector<8x128xf32> to vector<8x32xf32>
    %256 = vector.extract_strided_slice %252 {offsets = [0, 96], sizes = [8, 32], strides = [1, 1]} : vector<8x128xf32> to vector<8x32xf32>
    %257 = arith.mulf %254, %220 : vector<8x32xf32>
    %258 = arith.mulf %253, %255 : vector<8x32xf32>
    %259 = arith.addf %257, %258 : vector<8x32xf32>
    %260 = math.tanh %259 : vector<8x32xf32>
    %261 = arith.mulf %256, %260 : vector<8x32xf32>
    %262 = vector.extract_strided_slice %9 {offsets = [48, 0], sizes = [8, 128], strides = [1, 1]} : vector<64x128xf32> to vector<8x128xf32>
    %cst_26 = arith.constant dense<0.000000e+00> : vector<8x128xf32>
    %263 = tpu.matmul %241, %10, %cst_26 {dimension_numbers = #tpu.dot_dimension_numbers<[1], [0], [0], [1], [0, 0, 1, 1], [], []>} : vector<8x32xf32>, vector<32x128xf32>, vector<8x128xf32> -> vector<8x128xf32>
    %264 = arith.addf %262, %263 : vector<8x128xf32>
    %265 = vector.broadcast %20 : vector<1x128xf32> to vector<8x128xf32>
    %266 = arith.mulf %265, %264 : vector<8x128xf32>
    %267 = math.tanh %266 : vector<8x128xf32>
    %268 = vector.broadcast %23 : vector<1x128xf32> to vector<8x128xf32>
    %269 = arith.mulf %268, %267 : vector<8x128xf32>
    %270 = vector.broadcast %26 : vector<1x128xf32> to vector<8x128xf32>
    %271 = arith.addf %269, %270 : vector<8x128xf32>
    %272 = vector.extract_strided_slice %271 {offsets = [0, 0], sizes = [8, 32], strides = [1, 1]} : vector<8x128xf32> to vector<8x32xf32>
    %273 = vector.extract_strided_slice %271 {offsets = [0, 32], sizes = [8, 32], strides = [1, 1]} : vector<8x128xf32> to vector<8x32xf32>
    %274 = vector.extract_strided_slice %271 {offsets = [0, 64], sizes = [8, 32], strides = [1, 1]} : vector<8x128xf32> to vector<8x32xf32>
    %275 = vector.extract_strided_slice %271 {offsets = [0, 96], sizes = [8, 32], strides = [1, 1]} : vector<8x128xf32> to vector<8x32xf32>
    %276 = arith.mulf %273, %239 : vector<8x32xf32>
    %277 = arith.mulf %272, %274 : vector<8x32xf32>
    %278 = arith.addf %276, %277 : vector<8x32xf32>
    %279 = math.tanh %278 : vector<8x32xf32>
    %280 = arith.mulf %275, %279 : vector<8x32xf32>
    %281 = tpu.concatenate %280, %261 in 1 : vector<8x32xf32>, vector<8x32xf32> -> vector<8x64xf32>
    %cst_27 = arith.constant dense<0.000000e+00> : vector<8x128xf32>
    %282 = tpu.matmul %281, %11, %cst_27 {dimension_numbers = #tpu.dot_dimension_numbers<[1], [0], [0], [1], [0, 0, 1, 1], [], []>} : vector<8x64xf32>, vector<64x128xf32>, vector<8x128xf32> -> vector<8x128xf32>
    %283 = vector.broadcast %2 : vector<1x128xf32> to vector<8x128xf32>
    %284 = arith.addf %282, %283 : vector<8x128xf32>
    %285 = vector.broadcast %20 : vector<1x128xf32> to vector<8x128xf32>
    %286 = arith.mulf %285, %284 : vector<8x128xf32>
    %287 = math.tanh %286 : vector<8x128xf32>
    %288 = vector.broadcast %23 : vector<1x128xf32> to vector<8x128xf32>
    %289 = arith.mulf %288, %287 : vector<8x128xf32>
    %290 = vector.broadcast %26 : vector<1x128xf32> to vector<8x128xf32>
    %291 = arith.addf %289, %290 : vector<8x128xf32>
    %292 = vector.extract_strided_slice %291 {offsets = [0, 0], sizes = [8, 32], strides = [1, 1]} : vector<8x128xf32> to vector<8x32xf32>
    %293 = vector.extract_strided_slice %291 {offsets = [0, 32], sizes = [8, 32], strides = [1, 1]} : vector<8x128xf32> to vector<8x32xf32>
    %294 = vector.extract_strided_slice %291 {offsets = [0, 64], sizes = [8, 32], strides = [1, 1]} : vector<8x128xf32> to vector<8x32xf32>
    %295 = vector.extract_strided_slice %291 {offsets = [0, 96], sizes = [8, 32], strides = [1, 1]} : vector<8x128xf32> to vector<8x32xf32>
    %296 = arith.mulf %293, %259 : vector<8x32xf32>
    %297 = arith.mulf %292, %294 : vector<8x32xf32>
    %298 = arith.addf %296, %297 : vector<8x32xf32>
    %299 = math.tanh %298 : vector<8x32xf32>
    %300 = arith.mulf %295, %299 : vector<8x32xf32>
    %301 = vector.extract_strided_slice %9 {offsets = [56, 0], sizes = [8, 128], strides = [1, 1]} : vector<64x128xf32> to vector<8x128xf32>
    %cst_28 = arith.constant dense<0.000000e+00> : vector<8x128xf32>
    %302 = tpu.matmul %280, %10, %cst_28 {dimension_numbers = #tpu.dot_dimension_numbers<[1], [0], [0], [1], [0, 0, 1, 1], [], []>} : vector<8x32xf32>, vector<32x128xf32>, vector<8x128xf32> -> vector<8x128xf32>
    %303 = arith.addf %301, %302 : vector<8x128xf32>
    %304 = vector.broadcast %20 : vector<1x128xf32> to vector<8x128xf32>
    %305 = arith.mulf %304, %303 : vector<8x128xf32>
    %306 = math.tanh %305 : vector<8x128xf32>
    %307 = vector.broadcast %23 : vector<1x128xf32> to vector<8x128xf32>
    %308 = arith.mulf %307, %306 : vector<8x128xf32>
    %309 = vector.broadcast %26 : vector<1x128xf32> to vector<8x128xf32>
    %310 = arith.addf %308, %309 : vector<8x128xf32>
    %311 = vector.extract_strided_slice %310 {offsets = [0, 0], sizes = [8, 32], strides = [1, 1]} : vector<8x128xf32> to vector<8x32xf32>
    %312 = vector.extract_strided_slice %310 {offsets = [0, 32], sizes = [8, 32], strides = [1, 1]} : vector<8x128xf32> to vector<8x32xf32>
    %313 = vector.extract_strided_slice %310 {offsets = [0, 64], sizes = [8, 32], strides = [1, 1]} : vector<8x128xf32> to vector<8x32xf32>
    %314 = vector.extract_strided_slice %310 {offsets = [0, 96], sizes = [8, 32], strides = [1, 1]} : vector<8x128xf32> to vector<8x32xf32>
    %315 = arith.mulf %312, %278 : vector<8x32xf32>
    %316 = arith.mulf %311, %313 : vector<8x32xf32>
    %317 = arith.addf %315, %316 : vector<8x32xf32>
    %318 = math.tanh %317 : vector<8x32xf32>
    %319 = arith.mulf %314, %318 : vector<8x32xf32>
    %320 = tpu.concatenate %319, %300 in 1 : vector<8x32xf32>, vector<8x32xf32> -> vector<8x64xf32>
    %cst_29 = arith.constant dense<0.000000e+00> : vector<8x128xf32>
    %321 = tpu.matmul %320, %11, %cst_29 {dimension_numbers = #tpu.dot_dimension_numbers<[1], [0], [0], [1], [0, 0, 1, 1], [], []>} : vector<8x64xf32>, vector<64x128xf32>, vector<8x128xf32> -> vector<8x128xf32>
    %322 = vector.broadcast %2 : vector<1x128xf32> to vector<8x128xf32>
    %323 = arith.addf %321, %322 : vector<8x128xf32>
    %324 = vector.broadcast %20 : vector<1x128xf32> to vector<8x128xf32>
    %325 = arith.mulf %324, %323 : vector<8x128xf32>
    %326 = math.tanh %325 : vector<8x128xf32>
    %327 = vector.broadcast %23 : vector<1x128xf32> to vector<8x128xf32>
    %328 = arith.mulf %327, %326 : vector<8x128xf32>
    %329 = vector.broadcast %26 : vector<1x128xf32> to vector<8x128xf32>
    %330 = arith.addf %328, %329 : vector<8x128xf32>
    %331 = vector.extract_strided_slice %330 {offsets = [0, 0], sizes = [8, 32], strides = [1, 1]} : vector<8x128xf32> to vector<8x32xf32>
    %332 = vector.extract_strided_slice %330 {offsets = [0, 32], sizes = [8, 32], strides = [1, 1]} : vector<8x128xf32> to vector<8x32xf32>
    %333 = vector.extract_strided_slice %330 {offsets = [0, 64], sizes = [8, 32], strides = [1, 1]} : vector<8x128xf32> to vector<8x32xf32>
    %334 = vector.extract_strided_slice %330 {offsets = [0, 96], sizes = [8, 32], strides = [1, 1]} : vector<8x128xf32> to vector<8x32xf32>
    %335 = arith.mulf %332, %298 : vector<8x32xf32>
    %336 = arith.mulf %331, %333 : vector<8x32xf32>
    %337 = arith.addf %335, %336 : vector<8x32xf32>
    %338 = math.tanh %337 : vector<8x32xf32>
    %339 = arith.mulf %334, %338 : vector<8x32xf32>
    %c112 = arith.constant 112 : index
    %c0_30 = arith.constant 0 : index
    %340 = vector.load %arg1[%c112, %c0_30] : memref<272x128xf32, #tpu.memory_space<vmem>>, vector<32x128xf32>
    %cst_31 = arith.constant dense<0.000000e+00> : vector<8x128xf32>
    %341 = tpu.matmul %339, %340, %cst_31 {dimension_numbers = #tpu.dot_dimension_numbers<[1], [0], [0], [1], [0, 0, 1, 1], [], []>} : vector<8x32xf32>, vector<32x128xf32>, vector<8x128xf32> -> vector<8x128xf32>
    %342 = vector.broadcast %3 : vector<1x128xf32> to vector<8x128xf32>
    %343 = arith.addf %341, %342 : vector<8x128xf32>
    %cst_32 = arith.constant 0.000000e+00 : f32
    %344 = vector.broadcast %cst_32 : f32 to vector<8x128xf32>
    %345 = arith.maximumf %343, %344 : vector<8x128xf32>
    %c144 = arith.constant 144 : index
    %c0_33 = arith.constant 0 : index
    %346 = vector.load %arg1[%c144, %c0_33] : memref<272x128xf32, #tpu.memory_space<vmem>>, vector<128x128xf32>
    %cst_34 = arith.constant dense<0.000000e+00> : vector<8x128xf32>
    %347 = tpu.matmul %345, %346, %cst_34 {dimension_numbers = #tpu.dot_dimension_numbers<[1], [0], [0], [1], [0, 0, 1, 1], [], []>} : vector<8x128xf32>, vector<128x128xf32>, vector<8x128xf32> -> vector<8x128xf32>
    %348 = vector.broadcast %4 : vector<1x128xf32> to vector<8x128xf32>
    %349 = arith.addf %347, %348 : vector<8x128xf32>
    %c0_35 = arith.constant 0 : index
    %c0_36 = arith.constant 0 : index
    %350 = vector.load %arg3[%c0_35, %c0_36] : memref<8x128xf32, #tpu.memory_space<vmem>>, vector<8x128xf32>
    tpu.vector_store %arg3[%c0_35, %c0_36], %349 {strides = array<i32>} : memref<8x128xf32, #tpu.memory_space<vmem>>, vector<8x128xf32>,
    return
  }
}

</mosaic_0001>

<llo_original>
// kernel: lstm_model_forward.1
$region0: #{lstm_model_forward.1}
  #allocation0 [shape = 'u32[]', space=smem, size = 0x4, offset = 0x4, fixed_abs, tag = 'smem constant byte address 0x4 - core index']
  #allocation1 [shape = 'u32[144,128]{1,0:T(1,128)}', space=vmem, size = 0x12000, scoped, tag = 'internal scratch']
  %s0 = inlined_call_operand.vmem [shape: f32[64,16], index: 0, kind: input, shape index: {}]
  %s1 = inlined_call_operand.hbm [shape: f32[272,128], index: 1, kind: input, shape index: {}]
  %s2 = inlined_call_operand.vmem [shape: f32[4,128], index: 2, kind: input, shape index: {}]
  %s3 = inlined_call_operand.vmem [shape: f32[8,128], index: 3, kind: output, shape index: {}]
  %s4 = sld [smem:[#allocation0]]
  $region26: #{lstm_model_forward.1} parent=0
    _
  %s6 = ssub.s32 1, %s4
  %s7 = scalar_select 0, %s6, %s4
  $region1: #{lstm_model_forward.1} parent=0
    #allocation2 [shape = 'u8[139264]{0}', space=vmem, size = 0x22000, scoped, tag = 'input window, operand 1, single buffered']
    #allocation3 [shape = 's32[1]{0}', space=sflag, size = 0x4, scoped, tag = 'scoped memory for lstm_model_forward.1']
    %8 = vsyncpa [#allocation3], 0
    // Predicated region
    $region2: #{lstm_model_forward.1} parent=1 // pred_check
      _
    $region3: #{lstm_model_forward.1} parent=1 // pred_check_branch
      %10 = sbr.rel (0) target = $region5
    $region4: #{lstm_model_forward.1} parent=1 // pred_region
      _
    $region5: #{lstm_model_forward.1} parent=1 // pred_fallthru
      _
    // Predicated region
    $region6: #{lstm_model_forward.1} parent=1 // pred_check
      _
    $region7: #{lstm_model_forward.1} parent=1 // pred_check_branch
      %12 = sbr.rel (0) target = $region9
    $region8: #{lstm_model_forward.1} parent=1 // pred_region
      %s14 = ssub.s32 4352, 4352
      %15 = vsyncadd [#allocation3], %s14
      %s16 = sshll.u32 [#allocation2], 4
      %s17 = int_to_ptr.vmem [resolvable:$true] %s16
      %22 = dma.hbm_to_vmem [thread:$0]  %s1, 4352, %s17, [#allocation3], 128, 128, 8
    $region9: #{lstm_model_forward.1} parent=1 // pred_fallthru
      _
    // Predicated region
    $region10: #{lstm_model_forward.1} parent=1 // pred_check
      _
    $region11: #{lstm_model_forward.1} parent=1 // pred_check_branch
      %24 = sbr.rel (0) target = $region13
    $region12: #{lstm_model_forward.1} parent=1 // pred_region
      _
    $region13: #{lstm_model_forward.1} parent=1 // pred_fallthru
      _
    // Predicated region
    $region14: #{lstm_model_forward.1} parent=1 // pred_check
      _
    $region15: #{lstm_model_forward.1} parent=1 // pred_check_branch
      %26 = sbr.rel (0) target = $region17
    $region16: #{lstm_model_forward.1} parent=1 // pred_region
      %27 = dma.done [#allocation3], 4352
    $region17: #{lstm_model_forward.1} parent=1 // pred_fallthru
      _
    %v28 = vld [vmem:[%s2] sm:$0xf]
    %v29 = vld [vmem:[%s0] sm:$0xff]
    %v30 = vld [vmem:[%s0 + $0x8] sm:$0xff]
    %v31 = vld [vmem:[%s0 + $0x10] sm:$0xff]
    %v32 = vld [vmem:[%s0 + $0x18] sm:$0xff]
    %v33 = vld [vmem:[%s0 + $0x20] sm:$0xff]
    %v34 = vld [vmem:[%s0 + $0x28] sm:$0xff]
    %v35 = vld [vmem:[%s0 + $0x30] sm:$0xff]
    %v36 = vld [vmem:[%s0 + $0x38] sm:$0xff]
    %v37 = vld [vmem:[#allocation2] sm:$0xff]
    %v38 = vld [vmem:[#allocation2 + $0x8] sm:$0xff]
    %v39 = vlaneseq
    %v40 = vshrl.u32 %v39, 7
    %v41 = vsub.s32 0, %v40
    %v42 = vrot.slane %v28, %v41
    %vm43 = vcmask 130048
    %v45 = vsel %vm43, %v29, 0
    %v48 = vsel %vm43, %v30, 0
    %v51 = vsel %vm43, %v31, 0
    %v54 = vsel %vm43, %v32, 0
    %v57 = vsel %vm43, %v33, 0
    %v60 = vsel %vm43, %v34, 0
    %v63 = vsel %vm43, %v35, 0
    %v66 = vsel %vm43, %v36, 0
    %68 = vmatprep.subr.mxu0 0.0
    %69 = vmatpush1.msra.mxu0 %v37
    %70 = vmatprep.subr.mxu0 0.0
    %71 = vmatpush1.msra.mxu0 %v38
    %72 = vmatprep.subr.mxu0 0.0
    %73 = vmatpush1.msra.mxu0 0.0
    %74 = vmatprep.subr.mxu0 0.0
    %75 = vmatpush1.msra.mxu0 0.0
    %76 = vmatprep.subr.mxu0 0.0
    %77 = vmatpush1.msra.mxu0 0.0
    %78 = vmatprep.subr.mxu0 0.0
    %79 = vmatpush1.msra.mxu0 0.0
    %80 = vmatprep.subr.mxu0 0.0
    %81 = vmatpush1.msra.mxu0 0.0
    %82 = vmatprep.subr.mxu0 0.0
    %83 = vmatpush1.msra.mxu0 0.0
    %84 = vmatprep.subr.mxu0 0.0
    %85 = vmatpush1.msra.mxu0 0.0
    %86 = vmatprep.subr.mxu0 0.0
    %87 = vmatpush1.msra.mxu0 0.0
    %88 = vmatprep.subr.mxu0 0.0
    %89 = vmatpush1.msra.mxu0 0.0
    %90 = vmatprep.subr.mxu0 0.0
    %91 = vmatpush1.msra.mxu0 0.0
    %92 = vmatprep.subr.mxu0 0.0
    %93 = vmatpush1.msra.mxu0 0.0
    %94 = vmatprep.subr.mxu0 0.0
    %95 = vmatpush1.msra.mxu0 0.0
    %96 = vmatprep.subr.mxu0 0.0
    %97 = vmatpush1.msra.mxu0 0.0
    %98 = vmatprep.subr.mxu0 0.0
    %99 = vmatpush1.msra.mxu0 0.0
    %100 = vmatprep.subr.mxu0 0.0
    %101 = vmatpush1.msra.mxu0 0.0
    %102 = vmatprep.subr.mxu0 0.0
    %103 = vmatpush1.msra.mxu0 0.0
    %104 = vmatprep.subr.mxu0 0.0
    %105 = vmatpush1.msra.mxu0 0.0
    %106 = vmatprep.subr.mxu0 0.0
    %107 = vmatpush1.msra.mxu0 0.0
    %108 = vmatprep.subr.mxu0 0.0
    %109 = vmatpush1.msra.mxu0 0.0
    %110 = vmatprep.subr.mxu0 0.0
    %111 = vmatpush1.msra.mxu0 0.0
    %112 = vmatprep.subr.mxu0 0.0
    %113 = vmatpush1.msra.mxu0 0.0
    %114 = vmatprep.subr.mxu0 0.0
    %115 = vmatpush1.msra.mxu0 0.0
    %116 = vmatprep.subr.mxu0 0.0
    %117 = vmatpush1.msra.mxu0 0.0
    %118 = vmatprep.subr.mxu0 0.0
    %119 = vmatpush1.msra.mxu0 0.0
    %120 = vmatprep.subr.mxu0 0.0
    %121 = vmatpush1.msra.mxu0 0.0
    %122 = vmatprep.subr.mxu0 0.0
    %123 = vmatpush1.msra.mxu0 0.0
    %124 = vmatprep.subr.mxu0 0.0
    %125 = vmatpush1.msra.mxu0 0.0
    %126 = vmatprep.subr.mxu0 0.0
    %127 = vmatpush1.msra.mxu0 0.0
    %128 = vmatprep.subr.mxu0 0.0
    %129 = vmatpush1.msra.mxu0 0.0
    %130 = vmatprep.subr.mxu0 0.0
    %131 = vmatpush1.msra.mxu0 0.0
    %132 = vmatprep.mubr.f32.mxu0 0.0
    %133 = vmatmul.mubr.f32.gmra.mrb[0].mxu0 %v45
    %v134 = vpop.f32.mrb[0].mxu0
    %v135 = vadd.f32 %v42, %v134
    %v136 = vpop.f32.mrb[0].mxu0
    %137 = vmatprep.mubr.f32.mxu0 0.0
    %138 = vmatmul.mubr.f32.gmra.mrb[0].mxu0 %v48
    %v139 = vpop.f32.mrb[0].mxu0
    %v140 = vadd.f32 %v42, %v139
    %v141 = vpop.f32.mrb[0].mxu0
    %142 = vmatprep.mubr.f32.mxu0 0.0
    %143 = vmatmul.mubr.f32.gmra.mrb[0].mxu0 %v51
    %v144 = vpop.f32.mrb[0].mxu0
    %v145 = vadd.f32 %v42, %v144
    %v146 = vpop.f32.mrb[0].mxu0
    %147 = vmatprep.mubr.f32.mxu0 0.0
    %148 = vmatmul.mubr.f32.gmra.mrb[0].mxu0 %v54
    %v149 = vpop.f32.mrb[0].mxu0
    %v150 = vadd.f32 %v42, %v149
    %v151 = vpop.f32.mrb[0].mxu0
    %152 = vmatprep.mubr.f32.mxu0 0.0
    %153 = vmatmul.mubr.f32.gmra.mrb[0].mxu0 %v57
    %v154 = vpop.f32.mrb[0].mxu0
    %v155 = vadd.f32 %v42, %v154
    %v156 = vpop.f32.mrb[0].mxu0
    %157 = vmatprep.mubr.f32.mxu0 0.0
    %158 = vmatmul.mubr.f32.gmra.mrb[0].mxu0 %v60
    %v159 = vpop.f32.mrb[0].mxu0
    %v160 = vadd.f32 %v42, %v159
    %v161 = vpop.f32.mrb[0].mxu0
    %162 = vmatprep.mubr.f32.mxu0 0.0
    %163 = vmatmul.mubr.f32.gmra.mrb[0].mxu0 %v63
    %v164 = vpop.f32.mrb[0].mxu0
    %v165 = vadd.f32 %v42, %v164
    %v166 = vpop.f32.mrb[0].mxu0
    %167 = vmatprep.mubr.f32.mxu0 0.0
    %168 = vmatmul.mubr.f32.gmra.mrb[0].mxu0 %v66
    %v169 = vpop.f32.mrb[0].mxu0
    %v170 = vadd.f32 %v42, %v169
    %v171 = vpop.f32.mrb[0].mxu0
    %172 = vdwg.mxu0
    %v173 = vld [vmem:[#allocation2 + $0x10] sm:$0xff]
    %v174 = vld [vmem:[#allocation2 + $0x18] sm:$0xff]
    %v175 = vld [vmem:[#allocation2 + $0x20] sm:$0xff]
    %v176 = vld [vmem:[#allocation2 + $0x28] sm:$0xff]
    %v177 = vld [vmem:[#allocation2 + $0x30] sm:$0xff]
    %v178 = vld [vmem:[#allocation2 + $0x38] sm:$0xff]
    %v179 = vld [vmem:[#allocation2 + $0x40] sm:$0xff]
    %v180 = vld [vmem:[#allocation2 + $0x48] sm:$0xff]
    %v181 = vld [vmem:[#allocation2 + $0x50] sm:$0xff]
    %v182 = vld [vmem:[#allocation2 + $0x58] sm:$0xff]
    %v183 = vld [vmem:[#allocation2 + $0x60] sm:$0xff]
    %v184 = vld [vmem:[#allocation2 + $0x68] sm:$0xff]
    %v185 = vlaneseq
    %v186 = vand.u32 %v185, 127
    %vm187 = vcmp.ge.s32.totalorder %v186, 64
    %vm188 = vcmp.lt.s32.totalorder %v186, 96
    %vm189 = vmand %vm187, %vm188
    %v190 = vsel %vm189, 1.0, 0.5
    %v191 = vsel %vm189, 0.0, 0.5
    %vm192 = vcmask 261120
    %v194 = vsel %vm192, 0.0, 0
    %196 = vmatprep.subr.mxu0 0.0
    %197 = vmatpush1.msra.mxu0 %v173
    %198 = vmatprep.subr.mxu0 0.0
    %199 = vmatpush1.msra.mxu0 %v174
    %200 = vmatprep.subr.mxu0 0.0
    %201 = vmatpush1.msra.mxu0 %v175
    %202 = vmatprep.subr.mxu0 0.0
    %203 = vmatpush1.msra.mxu0 %v176
    %204 = vmatprep.subr.mxu0 0.0
    %205 = vmatpush1.msra.mxu0 0.0
    %206 = vmatprep.subr.mxu0 0.0
    %207 = vmatpush1.msra.mxu0 0.0
    %208 = vmatprep.subr.mxu0 0.0
    %209 = vmatpush1.msra.mxu0 0.0
    %210 = vmatprep.subr.mxu0 0.0
    %211 = vmatpush1.msra.mxu0 0.0
    %212 = vmatprep.subr.mxu0 0.0
    %213 = vmatpush1.msra.mxu0 0.0
    %214 = vmatprep.subr.mxu0 0.0
    %215 = vmatpush1.msra.mxu0 0.0
    %216 = vmatprep.subr.mxu0 0.0
    %217 = vmatpush1.msra.mxu0 0.0
    %218 = vmatprep.subr.mxu0 0.0
    %219 = vmatpush1.msra.mxu0 0.0
    %220 = vmatprep.subr.mxu0 0.0
    %221 = vmatpush1.msra.mxu0 0.0
    %222 = vmatprep.subr.mxu0 0.0
    %223 = vmatpush1.msra.mxu0 0.0
    %224 = vmatprep.subr.mxu0 0.0
    %225 = vmatpush1.msra.mxu0 0.0
    %226 = vmatprep.subr.mxu0 0.0
    %227 = vmatpush1.msra.mxu0 0.0
    %228 = vmatprep.subr.mxu0 0.0
    %229 = vmatpush1.msra.mxu0 0.0
    %230 = vmatprep.subr.mxu0 0.0
    %231 = vmatpush1.msra.mxu0 0.0
    %232 = vmatprep.subr.mxu0 0.0
    %233 = vmatpush1.msra.mxu0 0.0
    %234 = vmatprep.subr.mxu0 0.0
    %235 = vmatpush1.msra.mxu0 0.0
    %236 = vmatprep.subr.mxu0 0.0
    %237 = vmatpush1.msra.mxu0 0.0
    %238 = vmatprep.subr.mxu0 0.0
    %239 = vmatpush1.msra.mxu0 0.0
    %240 = vmatprep.subr.mxu0 0.0
    %241 = vmatpush1.msra.mxu0 0.0
    %242 = vmatprep.subr.mxu0 0.0
    %243 = vmatpush1.msra.mxu0 0.0
    %244 = vmatprep.subr.mxu0 0.0
    %245 = vmatpush1.msra.mxu0 0.0
    %246 = vmatprep.subr.mxu0 0.0
    %247 = vmatpush1.msra.mxu0 0.0
    %248 = vmatprep.subr.mxu0 0.0
    %249 = vmatpush1.msra.mxu0 0.0
    %250 = vmatprep.subr.mxu0 0.0
    %251 = vmatpush1.msra.mxu0 0.0
    %252 = vmatprep.subr.mxu0 0.0
    %253 = vmatpush1.msra.mxu0 0.0
    %254 = vmatprep.subr.mxu0 0.0
    %255 = vmatpush1.msra.mxu0 0.0
    %256 = vmatprep.subr.mxu0 0.0
    %257 = vmatpush1.msra.mxu0 0.0
    %258 = vmatprep.subr.mxu0 0.0
    %259 = vmatpush1.msra.mxu0 0.0
    %260 = vmatprep.mubr.f32.mxu0 0.0
    %261 = vmatmul.mubr.f32.gmra.mrb[0].mxu0 %v194
    %v262 = vpop.f32.mrb[0].mxu0
    %v263 = vadd.f32 0.0, %v262
    %v264 = vpop.f32.mrb[0].mxu0
    %265 = vdwg.mxu0
    %v266 = vadd.f32 %v135, %v263
    %v267 = vmul.f32 %v190, %v266
    %v268 = vtanh.pop %v267
    %v269 = vmul.f32 %v190, %v268
    %v270 = vadd.f32 %v269, %v191
    %v271 = vmul.f32 %v270, 0.0
    %273 = vrot.lane.b32.xlu0 %v270, 64
    %v274 = vpop.permute.xlu0 %273
    %v276 = vmul.f32 %v270, %v274
    %278 = vrot.lane.b32.xlu0 %v276, 32
    %v279 = vpop.permute.xlu0 %278
    %v281 = vadd.f32 %v271, %v279
    %v282 = vtanh.pop %v281
    %284 = vrot.lane.b32.xlu0 %v282, 64
    %v285 = vpop.permute.xlu0 %284
    %v287 = vmul.f32 %v270, %v285
    %289 = vrot.lane.b32.xlu0 %v287, 32
    %v290 = vpop.permute.xlu0 %289
    %v292 = vsel %vm192, %v290, 0.0
    %v293 = vlaneseq
    %v294 = vshrl.u32 %v293, 7
    %v295 = vsub.s32 1, %v294
    %v296 = vrot.slane %v28, %v295
    %vm297 = vcmask 523264
    %v299 = vsel %vm297, %v292, 0
    %301 = vmatprep.subr.mxu0 0.0
    %302 = vmatpush1.msra.mxu0 %v177
    %303 = vmatprep.subr.mxu0 0.0
    %304 = vmatpush1.msra.mxu0 %v178
    %305 = vmatprep.subr.mxu0 0.0
    %306 = vmatpush1.msra.mxu0 %v179
    %307 = vmatprep.subr.mxu0 0.0
    %308 = vmatpush1.msra.mxu0 %v180
    %309 = vmatprep.subr.mxu0 0.0
    %310 = vmatpush1.msra.mxu0 %v181
    %311 = vmatprep.subr.mxu0 0.0
    %312 = vmatpush1.msra.mxu0 %v182
    %313 = vmatprep.subr.mxu0 0.0
    %314 = vmatpush1.msra.mxu0 %v183
    %315 = vmatprep.subr.mxu0 0.0
    %316 = vmatpush1.msra.mxu0 %v184
    %317 = vmatprep.subr.mxu0 0.0
    %318 = vmatpush1.msra.mxu0 0.0
    %319 = vmatprep.subr.mxu0 0.0
    %320 = vmatpush1.msra.mxu0 0.0
    %321 = vmatprep.subr.mxu0 0.0
    %322 = vmatpush1.msra.mxu0 0.0
    %323 = vmatprep.subr.mxu0 0.0
    %324 = vmatpush1.msra.mxu0 0.0
    %325 = vmatprep.subr.mxu0 0.0
    %326 = vmatpush1.msra.mxu0 0.0
    %327 = vmatprep.subr.mxu0 0.0
    %328 = vmatpush1.msra.mxu0 0.0
    %329 = vmatprep.subr.mxu0 0.0
    %330 = vmatpush1.msra.mxu0 0.0
    %331 = vmatprep.subr.mxu0 0.0
    %332 = vmatpush1.msra.mxu0 0.0
    %333 = vmatprep.subr.mxu0 0.0
    %334 = vmatpush1.msra.mxu0 0.0
    %335 = vmatprep.subr.mxu0 0.0
    %336 = vmatpush1.msra.mxu0 0.0
    %337 = vmatprep.subr.mxu0 0.0
    %338 = vmatpush1.msra.mxu0 0.0
    %339 = vmatprep.subr.mxu0 0.0
    %340 = vmatpush1.msra.mxu0 0.0
    %341 = vmatprep.subr.mxu0 0.0
    %342 = vmatpush1.msra.mxu0 0.0
    %343 = vmatprep.subr.mxu0 0.0
    %344 = vmatpush1.msra.mxu0 0.0
    %345 = vmatprep.subr.mxu0 0.0
    %346 = vmatpush1.msra.mxu0 0.0
    %347 = vmatprep.subr.mxu0 0.0
    %348 = vmatpush1.msra.mxu0 0.0
    %349 = vmatprep.subr.mxu0 0.0
    %350 = vmatpush1.msra.mxu0 0.0
    %351 = vmatprep.subr.mxu0 0.0
    %352 = vmatpush1.msra.mxu0 0.0
    %353 = vmatprep.subr.mxu0 0.0
    %354 = vmatpush1.msra.mxu0 0.0
    %355 = vmatprep.subr.mxu0 0.0
    %356 = vmatpush1.msra.mxu0 0.0
    %357 = vmatprep.subr.mxu0 0.0
    %358 = vmatpush1.msra.mxu0 0.0
    %359 = vmatprep.subr.mxu0 0.0
    %360 = vmatpush1.msra.mxu0 0.0
    %361 = vmatprep.subr.mxu0 0.0
    %362 = vmatpush1.msra.mxu0 0.0
    %363 = vmatprep.subr.mxu0 0.0
    %364 = vmatpush1.msra.mxu0 0.0
    %365 = vmatprep.mubr.f32.mxu0 0.0
    %366 = vmatmul.mubr.f32.gmra.mrb[0].mxu0 %v299
    %v367 = vpop.f32.mrb[0].mxu0
    %v368 = vadd.f32 %v296, %v367
    %v369 = vpop.f32.mrb[0].mxu0
    %370 = vdwg.mxu0
    %v371 = vmul.f32 %v190, %v368
    %v372 = vtanh.pop %v371
    %v373 = vmul.f32 %v190, %v372
    %v374 = vadd.f32 %v373, %v191
    %v375 = vmul.f32 %v374, 0.0
    %377 = vrot.lane.b32.xlu0 %v374, 64
    %v378 = vpop.permute.xlu0 %377
    %v380 = vmul.f32 %v374, %v378
    %382 = vrot.lane.b32.xlu0 %v380, 32
    %v383 = vpop.permute.xlu0 %382
    %v385 = vadd.f32 %v375, %v383
    %v386 = vtanh.pop %v385
    %388 = vrot.lane.b32.xlu0 %v386, 64
    %v389 = vpop.permute.xlu0 %388
    %v391 = vmul.f32 %v374, %v389
    %v392 = vsel %vm192, %v290, 0
    %394 = vmatprep.subr.mxu0 0.0
    %395 = vmatpush1.msra.mxu0 %v173
    %396 = vmatprep.subr.mxu0 0.0
    %397 = vmatpush1.msra.mxu0 %v174
    %398 = vmatprep.subr.mxu0 0.0
    %399 = vmatpush1.msra.mxu0 %v175
    %400 = vmatprep.subr.mxu0 0.0
    %401 = vmatpush1.msra.mxu0 %v176
    %402 = vmatprep.subr.mxu0 0.0
    %403 = vmatpush1.msra.mxu0 0.0
    %404 = vmatprep.subr.mxu0 0.0
    %405 = vmatpush1.msra.mxu0 0.0
    %406 = vmatprep.subr.mxu0 0.0
    %407 = vmatpush1.msra.mxu0 0.0
    %408 = vmatprep.subr.mxu0 0.0
    %409 = vmatpush1.msra.mxu0 0.0
    %410 = vmatprep.subr.mxu0 0.0
    %411 = vmatpush1.msra.mxu0 0.0
    %412 = vmatprep.subr.mxu0 0.0
    %413 = vmatpush1.msra.mxu0 0.0
    %414 = vmatprep.subr.mxu0 0.0
    %415 = vmatpush1.msra.mxu0 0.0
    %416 = vmatprep.subr.mxu0 0.0
    %417 = vmatpush1.msra.mxu0 0.0
    %418 = vmatprep.subr.mxu0 0.0
    %419 = vmatpush1.msra.mxu0 0.0
    %420 = vmatprep.subr.mxu0 0.0
    %421 = vmatpush1.msra.mxu0 0.0
    %422 = vmatprep.subr.mxu0 0.0
    %423 = vmatpush1.msra.mxu0 0.0
    %424 = vmatprep.subr.mxu0 0.0
    %425 = vmatpush1.msra.mxu0 0.0
    %426 = vmatprep.subr.mxu0 0.0
    %427 = vmatpush1.msra.mxu0 0.0
    %428 = vmatprep.subr.mxu0 0.0
    %429 = vmatpush1.msra.mxu0 0.0
    %430 = vmatprep.subr.mxu0 0.0
    %431 = vmatpush1.msra.mxu0 0.0
    %432 = vmatprep.subr.mxu0 0.0
    %433 = vmatpush1.msra.mxu0 0.0
    %434 = vmatprep.subr.mxu0 0.0
    %435 = vmatpush1.msra.mxu0 0.0
    %436 = vmatprep.subr.mxu0 0.0
    %437 = vmatpush1.msra.mxu0 0.0
    %438 = vmatprep.subr.mxu0 0.0
    %439 = vmatpush1.msra.mxu0 0.0
    %440 = vmatprep.subr.mxu0 0.0
    %441 = vmatpush1.msra.mxu0 0.0
    %442 = vmatprep.subr.mxu0 0.0
    %443 = vmatpush1.msra.mxu0 0.0
    %444 = vmatprep.subr.mxu0 0.0
    %445 = vmatpush1.msra.mxu0 0.0
    %446 = vmatprep.subr.mxu0 0.0
    %447 = vmatpush1.msra.mxu0 0.0
    %448 = vmatprep.subr.mxu0 0.0
    %449 = vmatpush1.msra.mxu0 0.0
    %450 = vmatprep.subr.mxu0 0.0
    %451 = vmatpush1.msra.mxu0 0.0
    %452 = vmatprep.subr.mxu0 0.0
    %453 = vmatpush1.msra.mxu0 0.0
    %454 = vmatprep.subr.mxu0 0.0
    %455 = vmatpush1.msra.mxu0 0.0
    %456 = vmatprep.subr.mxu0 0.0
    %457 = vmatpush1.msra.mxu0 0.0
    %458 = vmatprep.mubr.f32.mxu0 0.0
    %459 = vmatmul.mubr.f32.gmra.mrb[0].mxu0 %v392
    %v460 = vpop.f32.mrb[0].mxu0
    %v461 = vadd.f32 0.0, %v460
    %v462 = vpop.f32.mrb[0].mxu0
    %463 = vdwg.mxu0
    %v464 = vadd.f32 %v140, %v461
    %v465 = vmul.f32 %v190, %v464
    %v466 = vtanh.pop %v465
    %v467 = vmul.f32 %v190, %v466
    %v468 = vadd.f32 %v467, %v191
    %v469 = vmul.f32 %v468, %v281
    %471 = vrot.lane.b32.xlu0 %v468, 64
    %v472 = vpop.permute.xlu0 %471
    %v474 = vmul.f32 %v468, %v472
    %476 = vrot.lane.b32.xlu0 %v474, 32
    %v477 = vpop.permute.xlu0 %476
    %v479 = vadd.f32 %v469, %v477
    %v480 = vtanh.pop %v479
    %482 = vrot.lane.b32.xlu0 %v480, 64
    %v483 = vpop.permute.xlu0 %482
    %v485 = vmul.f32 %v468, %v483
    %487 = vrot.lane.b32.xlu0 %v485, 32
    %v488 = vpop.permute.xlu0 %487
    %491 = vrot.lane.b32.xlu0 %v391, 64
    %v492 = vpop.permute.xlu0 %491
    %v494 = vsel %vm192, %v488, %v492
    %v496 = vsel %vm297, %v494, 0
    %498 = vmatprep.subr.mxu0 0.0
    %499 = vmatpush1.msra.mxu0 %v177
    %500 = vmatprep.subr.mxu0 0.0
    %501 = vmatpush1.msra.mxu0 %v178
    %502 = vmatprep.subr.mxu0 0.0
    %503 = vmatpush1.msra.mxu0 %v179
    %504 = vmatprep.subr.mxu0 0.0
    %505 = vmatpush1.msra.mxu0 %v180
    %506 = vmatprep.subr.mxu0 0.0
    %507 = vmatpush1.msra.mxu0 %v181
    %508 = vmatprep.subr.mxu0 0.0
    %509 = vmatpush1.msra.mxu0 %v182
    %510 = vmatprep.subr.mxu0 0.0
    %511 = vmatpush1.msra.mxu0 %v183
    %512 = vmatprep.subr.mxu0 0.0
    %513 = vmatpush1.msra.mxu0 %v184
    %514 = vmatprep.subr.mxu0 0.0
    %515 = vmatpush1.msra.mxu0 0.0
    %516 = vmatprep.subr.mxu0 0.0
    %517 = vmatpush1.msra.mxu0 0.0
    %518 = vmatprep.subr.mxu0 0.0
    %519 = vmatpush1.msra.mxu0 0.0
    %520 = vmatprep.subr.mxu0 0.0
    %521 = vmatpush1.msra.mxu0 0.0
    %522 = vmatprep.subr.mxu0 0.0
    %523 = vmatpush1.msra.mxu0 0.0
    %524 = vmatprep.subr.mxu0 0.0
    %525 = vmatpush1.msra.mxu0 0.0
    %526 = vmatprep.subr.mxu0 0.0
    %527 = vmatpush1.msra.mxu0 0.0
    %528 = vmatprep.subr.mxu0 0.0
    %529 = vmatpush1.msra.mxu0 0.0
    %530 = vmatprep.subr.mxu0 0.0
    %531 = vmatpush1.msra.mxu0 0.0
    %532 = vmatprep.subr.mxu0 0.0
    %533 = vmatpush1.msra.mxu0 0.0
    %534 = vmatprep.subr.mxu0 0.0
    %535 = vmatpush1.msra.mxu0 0.0
    %536 = vmatprep.subr.mxu0 0.0
    %537 = vmatpush1.msra.mxu0 0.0
    %538 = vmatprep.subr.mxu0 0.0
    %539 = vmatpush1.msra.mxu0 0.0
    %540 = vmatprep.subr.mxu0 0.0
    %541 = vmatpush1.msra.mxu0 0.0
    %542 = vmatprep.subr.mxu0 0.0
    %543 = vmatpush1.msra.mxu0 0.0
    %544 = vmatprep.subr.mxu0 0.0
    %545 = vmatpush1.msra.mxu0 0.0
    %546 = vmatprep.subr.mxu0 0.0
    %547 = vmatpush1.msra.mxu0 0.0
    %548 = vmatprep.subr.mxu0 0.0
    %549 = vmatpush1.msra.mxu0 0.0
    %550 = vmatprep.subr.mxu0 0.0
    %551 = vmatpush1.msra.mxu0 0.0
    %552 = vmatprep.subr.mxu0 0.0
    %553 = vmatpush1.msra.mxu0 0.0
    %554 = vmatprep.subr.mxu0 0.0
    %555 = vmatpush1.msra.mxu0 0.0
    %556 = vmatprep.subr.mxu0 0.0
    %557 = vmatpush1.msra.mxu0 0.0
    %558 = vmatprep.subr.mxu0 0.0
    %559 = vmatpush1.msra.mxu0 0.0
    %560 = vmatprep.subr.mxu0 0.0
    %561 = vmatpush1.msra.mxu0 0.0
    %562 = vmatprep.mubr.f32.mxu0 0.0
    %563 = vmatmul.mubr.f32.gmra.mrb[0].mxu0 %v496
    %v564 = vpop.f32.mrb[0].mxu0
    %v565 = vadd.f32 %v296, %v564
    %v566 = vpop.f32.mrb[0].mxu0
    %567 = vdwg.mxu0
    %v568 = vmul.f32 %v190, %v565
    %v569 = vtanh.pop %v568
    %v570 = vmul.f32 %v190, %v569
    %v571 = vadd.f32 %v570, %v191
    %v572 = vmul.f32 %v571, %v385
    %574 = vrot.lane.b32.xlu0 %v571, 64
    %v575 = vpop.permute.xlu0 %574
    %v577 = vmul.f32 %v571, %v575
    %579 = vrot.lane.b32.xlu0 %v577, 32
    %v580 = vpop.permute.xlu0 %579
    %v582 = vadd.f32 %v572, %v580
    %v583 = vtanh.pop %v582
    %585 = vrot.lane.b32.xlu0 %v583, 64
    %v586 = vpop.permute.xlu0 %585
    %v588 = vmul.f32 %v571, %v586
    %v589 = vsel %vm192, %v488, 0
    %591 = vmatprep.subr.mxu0 0.0
    %592 = vmatpush1.msra.mxu0 %v173
    %593 = vmatprep.subr.mxu0 0.0
    %594 = vmatpush1.msra.mxu0 %v174
    %595 = vmatprep.subr.mxu0 0.0
    %596 = vmatpush1.msra.mxu0 %v175
    %597 = vmatprep.subr.mxu0 0.0
    %598 = vmatpush1.msra.mxu0 %v176
    %599 = vmatprep.subr.mxu0 0.0
    %600 = vmatpush1.msra.mxu0 0.0
    %601 = vmatprep.subr.mxu0 0.0
    %602 = vmatpush1.msra.mxu0 0.0
    %603 = vmatprep.subr.mxu0 0.0
    %604 = vmatpush1.msra.mxu0 0.0
    %605 = vmatprep.subr.mxu0 0.0
    %606 = vmatpush1.msra.mxu0 0.0
    %607 = vmatprep.subr.mxu0 0.0
    %608 = vmatpush1.msra.mxu0 0.0
    %609 = vmatprep.subr.mxu0 0.0
    %610 = vmatpush1.msra.mxu0 0.0
    %611 = vmatprep.subr.mxu0 0.0
    %612 = vmatpush1.msra.mxu0 0.0
    %613 = vmatprep.subr.mxu0 0.0
    %614 = vmatpush1.msra.mxu0 0.0
    %615 = vmatprep.subr.mxu0 0.0
    %616 = vmatpush1.msra.mxu0 0.0
    %617 = vmatprep.subr.mxu0 0.0
    %618 = vmatpush1.msra.mxu0 0.0
    %619 = vmatprep.subr.mxu0 0.0
    %620 = vmatpush1.msra.mxu0 0.0
    %621 = vmatprep.subr.mxu0 0.0
    %622 = vmatpush1.msra.mxu0 0.0
    %623 = vmatprep.subr.mxu0 0.0
    %624 = vmatpush1.msra.mxu0 0.0
    %625 = vmatprep.subr.mxu0 0.0
    %626 = vmatpush1.msra.mxu0 0.0
    %627 = vmatprep.subr.mxu0 0.0
    %628 = vmatpush1.msra.mxu0 0.0
    %629 = vmatprep.subr.mxu0 0.0
    %630 = vmatpush1.msra.mxu0 0.0
    %631 = vmatprep.subr.mxu0 0.0
    %632 = vmatpush1.msra.mxu0 0.0
    %633 = vmatprep.subr.mxu0 0.0
    %634 = vmatpush1.msra.mxu0 0.0
    %635 = vmatprep.subr.mxu0 0.0
    %636 = vmatpush1.msra.mxu0 0.0
    %637 = vmatprep.subr.mxu0 0.0
    %638 = vmatpush1.msra.mxu0 0.0
    %639 = vmatprep.subr.mxu0 0.0
    %640 = vmatpush1.msra.mxu0 0.0
    %641 = vmatprep.subr.mxu0 0.0
    %642 = vmatpush1.msra.mxu0 0.0
    %643 = vmatprep.subr.mxu0 0.0
    %644 = vmatpush1.msra.mxu0 0.0
    %645 = vmatprep.subr.mxu0 0.0
    %646 = vmatpush1.msra.mxu0 0.0
    %647 = vmatprep.subr.mxu0 0.0
    %648 = vmatpush1.msra.mxu0 0.0
    %649 = vmatprep.subr.mxu0 0.0
    %650 = vmatpush1.msra.mxu0 0.0
    %651 = vmatprep.subr.mxu0 0.0
    %652 = vmatpush1.msra.mxu0 0.0
    %653 = vmatprep.subr.mxu0 0.0
    %654 = vmatpush1.msra.mxu0 0.0
    %655 = vmatprep.mubr.f32.mxu0 0.0
    %656 = vmatmul.mubr.f32.gmra.mrb[0].mxu0 %v589
    %v657 = vpop.f32.mrb[0].mxu0
    %v658 = vadd.f32 0.0, %v657
    %v659 = vpop.f32.mrb[0].mxu0
    %660 = vdwg.mxu0
    %v661 = vadd.f32 %v145, %v658
    %v662 = vmul.f32 %v190, %v661
    %v663 = vtanh.pop %v662
    %v664 = vmul.f32 %v190, %v663
    %v665 = vadd.f32 %v664, %v191
    %v666 = vmul.f32 %v665, %v479
    %668 = vrot.lane.b32.xlu0 %v665, 64
    %v669 = vpop.permute.xlu0 %668
    %v671 = vmul.f32 %v665, %v669
    %673 = vrot.lane.b32.xlu0 %v671, 32
    %v674 = vpop.permute.xlu0 %673
    %v676 = vadd.f32 %v666, %v674
    %v677 = vtanh.pop %v676
    %679 = vrot.lane.b32.xlu0 %v677, 64
    %v680 = vpop.permute.xlu0 %679
    %v682 = vmul.f32 %v665, %v680
    %684 = vrot.lane.b32.xlu0 %v682, 32
    %v685 = vpop.permute.xlu0 %684
    %688 = vrot.lane.b32.xlu0 %v588, 64
    %v689 = vpop.permute.xlu0 %688
    %v691 = vsel %vm192, %v685, %v689
    %v693 = vsel %vm297, %v691, 0
    %695 = vmatprep.subr.mxu0 0.0
    %696 = vmatpush1.msra.mxu0 %v177
    %697 = vmatprep.subr.mxu0 0.0
    %698 = vmatpush1.msra.mxu0 %v178
    %699 = vmatprep.subr.mxu0 0.0
    %700 = vmatpush1.msra.mxu0 %v179
    %701 = vmatprep.subr.mxu0 0.0
    %702 = vmatpush1.msra.mxu0 %v180
    %703 = vmatprep.subr.mxu0 0.0
    %704 = vmatpush1.msra.mxu0 %v181
    %705 = vmatprep.subr.mxu0 0.0
    %706 = vmatpush1.msra.mxu0 %v182
    %707 = vmatprep.subr.mxu0 0.0
    %708 = vmatpush1.msra.mxu0 %v183
    %709 = vmatprep.subr.mxu0 0.0
    %710 = vmatpush1.msra.mxu0 %v184
    %711 = vmatprep.subr.mxu0 0.0
    %712 = vmatpush1.msra.mxu0 0.0
    %713 = vmatprep.subr.mxu0 0.0
    %714 = vmatpush1.msra.mxu0 0.0
    %715 = vmatprep.subr.mxu0 0.0
    %716 = vmatpush1.msra.mxu0 0.0
    %717 = vmatprep.subr.mxu0 0.0
    %718 = vmatpush1.msra.mxu0 0.0
    %719 = vmatprep.subr.mxu0 0.0
    %720 = vmatpush1.msra.mxu0 0.0
    %721 = vmatprep.subr.mxu0 0.0
    %722 = vmatpush1.msra.mxu0 0.0
    %723 = vmatprep.subr.mxu0 0.0
    %724 = vmatpush1.msra.mxu0 0.0
    %725 = vmatprep.subr.mxu0 0.0
    %726 = vmatpush1.msra.mxu0 0.0
    %727 = vmatprep.subr.mxu0 0.0
    %728 = vmatpush1.msra.mxu0 0.0
    %729 = vmatprep.subr.mxu0 0.0
    %730 = vmatpush1.msra.mxu0 0.0
    %731 = vmatprep.subr.mxu0 0.0
    %732 = vmatpush1.msra.mxu0 0.0
    %733 = vmatprep.subr.mxu0 0.0
    %734 = vmatpush1.msra.mxu0 0.0
    %735 = vmatprep.subr.mxu0 0.0
    %736 = vmatpush1.msra.mxu0 0.0
    %737 = vmatprep.subr.mxu0 0.0
    %738 = vmatpush1.msra.mxu0 0.0
    %739 = vmatprep.subr.mxu0 0.0
    %740 = vmatpush1.msra.mxu0 0.0
    %741 = vmatprep.subr.mxu0 0.0
    %742 = vmatpush1.msra.mxu0 0.0
    %743 = vmatprep.subr.mxu0 0.0
    %744 = vmatpush1.msra.mxu0 0.0
    %745 = vmatprep.subr.mxu0 0.0
    %746 = vmatpush1.msra.mxu0 0.0
    %747 = vmatprep.subr.mxu0 0.0
    %748 = vmatpush1.msra.mxu0 0.0
    %749 = vmatprep.subr.mxu0 0.0
    %750 = vmatpush1.msra.mxu0 0.0
    %751 = vmatprep.subr.mxu0 0.0
    %752 = vmatpush1.msra.mxu0 0.0
    %753 = vmatprep.subr.mxu0 0.0
    %754 = vmatpush1.msra.mxu0 0.0
    %755 = vmatprep.subr.mxu0 0.0
    %756 = vmatpush1.msra.mxu0 0.0
    %757 = vmatprep.subr.mxu0 0.0
    %758 = vmatpush1.msra.mxu0 0.0
    %759 = vmatprep.mubr.f32.mxu0 0.0
    %760 = vmatmul.mubr.f32.gmra.mrb[0].mxu0 %v693
    %v761 = vpop.f32.mrb[0].mxu0
    %v762 = vadd.f32 %v296, %v761
    %v763 = vpop.f32.mrb[0].mxu0
    %764 = vdwg.mxu0
    %v765 = vmul.f32 %v190, %v762
    %v766 = vtanh.pop %v765
    %v767 = vmul.f32 %v190, %v766
    %v768 = vadd.f32 %v767, %v191
    %v769 = vmul.f32 %v768, %v582
    %771 = vrot.lane.b32.xlu0 %v768, 64
    %v772 = vpop.permute.xlu0 %771
    %v774 = vmul.f32 %v768, %v772
    %776 = vrot.lane.b32.xlu0 %v774, 32
    %v777 = vpop.permute.xlu0 %776
    %v779 = vadd.f32 %v769, %v777
    %v780 = vtanh.pop %v779
    %782 = vrot.lane.b32.xlu0 %v780, 64
    %v783 = vpop.permute.xlu0 %782
    %v785 = vmul.f32 %v768, %v783
    %v786 = vsel %vm192, %v685, 0
    %788 = vmatprep.subr.mxu0 0.0
    %789 = vmatpush1.msra.mxu0 %v173
    %790 = vmatprep.subr.mxu0 0.0
    %791 = vmatpush1.msra.mxu0 %v174
    %792 = vmatprep.subr.mxu0 0.0
    %793 = vmatpush1.msra.mxu0 %v175
    %794 = vmatprep.subr.mxu0 0.0
    %795 = vmatpush1.msra.mxu0 %v176
    %796 = vmatprep.subr.mxu0 0.0
    %797 = vmatpush1.msra.mxu0 0.0
    %798 = vmatprep.subr.mxu0 0.0
    %799 = vmatpush1.msra.mxu0 0.0
    %800 = vmatprep.subr.mxu0 0.0
    %801 = vmatpush1.msra.mxu0 0.0
    %802 = vmatprep.subr.mxu0 0.0
    %803 = vmatpush1.msra.mxu0 0.0
    %804 = vmatprep.subr.mxu0 0.0
    %805 = vmatpush1.msra.mxu0 0.0
    %806 = vmatprep.subr.mxu0 0.0
    %807 = vmatpush1.msra.mxu0 0.0
    %808 = vmatprep.subr.mxu0 0.0
    %809 = vmatpush1.msra.mxu0 0.0
    %810 = vmatprep.subr.mxu0 0.0
    %811 = vmatpush1.msra.mxu0 0.0
    %812 = vmatprep.subr.mxu0 0.0
    %813 = vmatpush1.msra.mxu0 0.0
    %814 = vmatprep.subr.mxu0 0.0
    %815 = vmatpush1.msra.mxu0 0.0
    %816 = vmatprep.subr.mxu0 0.0
    %817 = vmatpush1.msra.mxu0 0.0
    %818 = vmatprep.subr.mxu0 0.0
    %819 = vmatpush1.msra.mxu0 0.0
    %820 = vmatprep.subr.mxu0 0.0
    %821 = vmatpush1.msra.mxu0 0.0
    %822 = vmatprep.subr.mxu0 0.0
    %823 = vmatpush1.msra.mxu0 0.0
    %824 = vmatprep.subr.mxu0 0.0
    %825 = vmatpush1.msra.mxu0 0.0
    %826 = vmatprep.subr.mxu0 0.0
    %827 = vmatpush1.msra.mxu0 0.0
    %828 = vmatprep.subr.mxu0 0.0
    %829 = vmatpush1.msra.mxu0 0.0
    %830 = vmatprep.subr.mxu0 0.0
    %831 = vmatpush1.msra.mxu0 0.0
    %832 = vmatprep.subr.mxu0 0.0
    %833 = vmatpush1.msra.mxu0 0.0
    %834 = vmatprep.subr.mxu0 0.0
    %835 = vmatpush1.msra.mxu0 0.0
    %836 = vmatprep.subr.mxu0 0.0
    %837 = vmatpush1.msra.mxu0 0.0
    %838 = vmatprep.subr.mxu0 0.0
    %839 = vmatpush1.msra.mxu0 0.0
    %840 = vmatprep.subr.mxu0 0.0
    %841 = vmatpush1.msra.mxu0 0.0
    %842 = vmatprep.subr.mxu0 0.0
    %843 = vmatpush1.msra.mxu0 0.0
    %844 = vmatprep.subr.mxu0 0.0
    %845 = vmatpush1.msra.mxu0 0.0
    %846 = vmatprep.subr.mxu0 0.0
    %847 = vmatpush1.msra.mxu0 0.0
    %848 = vmatprep.subr.mxu0 0.0
    %849 = vmatpush1.msra.mxu0 0.0
    %850 = vmatprep.subr.mxu0 0.0
    %851 = vmatpush1.msra.mxu0 0.0
    %852 = vmatprep.mubr.f32.mxu0 0.0
    %853 = vmatmul.mubr.f32.gmra.mrb[0].mxu0 %v786
    %v854 = vpop.f32.mrb[0].mxu0
    %v855 = vadd.f32 0.0, %v854
    %v856 = vpop.f32.mrb[0].mxu0
    %857 = vdwg.mxu0
    %v858 = vadd.f32 %v150, %v855
    %v859 = vmul.f32 %v190, %v858
    %v860 = vtanh.pop %v859
    %v861 = vmul.f32 %v190, %v860
    %v862 = vadd.f32 %v861, %v191
    %v863 = vmul.f32 %v862, %v676
    %865 = vrot.lane.b32.xlu0 %v862, 64
    %v866 = vpop.permute.xlu0 %865
    %v868 = vmul.f32 %v862, %v866
    %870 = vrot.lane.b32.xlu0 %v868, 32
    %v871 = vpop.permute.xlu0 %870
    %v873 = vadd.f32 %v863, %v871
    %v874 = vtanh.pop %v873
    %876 = vrot.lane.b32.xlu0 %v874, 64
    %v877 = vpop.permute.xlu0 %876
    %v879 = vmul.f32 %v862, %v877
    %881 = vrot.lane.b32.xlu0 %v879, 32
    %v882 = vpop.permute.xlu0 %881
    %885 = vrot.lane.b32.xlu0 %v785, 64
    %v886 = vpop.permute.xlu0 %885
    %v888 = vsel %vm192, %v882, %v886
    %v890 = vsel %vm297, %v888, 0
    %892 = vmatprep.subr.mxu0 0.0
    %893 = vmatpush1.msra.mxu0 %v177
    %894 = vmatprep.subr.mxu0 0.0
    %895 = vmatpush1.msra.mxu0 %v178
    %896 = vmatprep.subr.mxu0 0.0
    %897 = vmatpush1.msra.mxu0 %v179
    %898 = vmatprep.subr.mxu0 0.0
    %899 = vmatpush1.msra.mxu0 %v180
    %900 = vmatprep.subr.mxu0 0.0
    %901 = vmatpush1.msra.mxu0 %v181
    %902 = vmatprep.subr.mxu0 0.0
    %903 = vmatpush1.msra.mxu0 %v182
    %904 = vmatprep.subr.mxu0 0.0
    %905 = vmatpush1.msra.mxu0 %v183
    %906 = vmatprep.subr.mxu0 0.0
    %907 = vmatpush1.msra.mxu0 %v184
    %908 = vmatprep.subr.mxu0 0.0
    %909 = vmatpush1.msra.mxu0 0.0
    %910 = vmatprep.subr.mxu0 0.0
    %911 = vmatpush1.msra.mxu0 0.0
    %912 = vmatprep.subr.mxu0 0.0
    %913 = vmatpush1.msra.mxu0 0.0
    %914 = vmatprep.subr.mxu0 0.0
    %915 = vmatpush1.msra.mxu0 0.0
    %916 = vmatprep.subr.mxu0 0.0
    %917 = vmatpush1.msra.mxu0 0.0
    %918 = vmatprep.subr.mxu0 0.0
    %919 = vmatpush1.msra.mxu0 0.0
    %920 = vmatprep.subr.mxu0 0.0
    %921 = vmatpush1.msra.mxu0 0.0
    %922 = vmatprep.subr.mxu0 0.0
    %923 = vmatpush1.msra.mxu0 0.0
    %924 = vmatprep.subr.mxu0 0.0
    %925 = vmatpush1.msra.mxu0 0.0
    %926 = vmatprep.subr.mxu0 0.0
    %927 = vmatpush1.msra.mxu0 0.0
    %928 = vmatprep.subr.mxu0 0.0
    %929 = vmatpush1.msra.mxu0 0.0
    %930 = vmatprep.subr.mxu0 0.0
    %931 = vmatpush1.msra.mxu0 0.0
    %932 = vmatprep.subr.mxu0 0.0
    %933 = vmatpush1.msra.mxu0 0.0
    %934 = vmatprep.subr.mxu0 0.0
    %935 = vmatpush1.msra.mxu0 0.0
    %936 = vmatprep.subr.mxu0 0.0
    %937 = vmatpush1.msra.mxu0 0.0
    %938 = vmatprep.subr.mxu0 0.0
    %939 = vmatpush1.msra.mxu0 0.0
    %940 = vmatprep.subr.mxu0 0.0
    %941 = vmatpush1.msra.mxu0 0.0
    %942 = vmatprep.subr.mxu0 0.0
    %943 = vmatpush1.msra.mxu0 0.0
    %944 = vmatprep.subr.mxu0 0.0
    %945 = vmatpush1.msra.mxu0 0.0
    %946 = vmatprep.subr.mxu0 0.0
    %947 = vmatpush1.msra.mxu0 0.0
    %948 = vmatprep.subr.mxu0 0.0
    %949 = vmatpush1.msra.mxu0 0.0
    %950 = vmatprep.subr.mxu0 0.0
    %951 = vmatpush1.msra.mxu0 0.0
    %952 = vmatprep.subr.mxu0 0.0
    %953 = vmatpush1.msra.mxu0 0.0
    %954 = vmatprep.subr.mxu0 0.0
    %955 = vmatpush1.msra.mxu0 0.0
    %956 = vmatprep.mubr.f32.mxu0 0.0
    %957 = vmatmul.mubr.f32.gmra.mrb[0].mxu0 %v890
    %v958 = vpop.f32.mrb[0].mxu0
    %v959 = vadd.f32 %v296, %v958
    %v960 = vpop.f32.mrb[0].mxu0
    %961 = vdwg.mxu0
    %v962 = vmul.f32 %v190, %v959
    %v963 = vtanh.pop %v962
    %v964 = vmul.f32 %v190, %v963
    %v965 = vadd.f32 %v964, %v191
    %v966 = vmul.f32 %v965, %v779
    %968 = vrot.lane.b32.xlu0 %v965, 64
    %v969 = vpop.permute.xlu0 %968
    %v971 = vmul.f32 %v965, %v969
    %973 = vrot.lane.b32.xlu0 %v971, 32
    %v974 = vpop.permute.xlu0 %973
    %v976 = vadd.f32 %v966, %v974
    %v977 = vtanh.pop %v976
    %979 = vrot.lane.b32.xlu0 %v977, 64
    %v980 = vpop.permute.xlu0 %979
    %v982 = vmul.f32 %v965, %v980
    %v983 = vsel %vm192, %v882, 0
    %985 = vmatprep.subr.mxu0 0.0
    %986 = vmatpush1.msra.mxu0 %v173
    %987 = vmatprep.subr.mxu0 0.0
    %988 = vmatpush1.msra.mxu0 %v174
    %989 = vmatprep.subr.mxu0 0.0
    %990 = vmatpush1.msra.mxu0 %v175
    %991 = vmatprep.subr.mxu0 0.0
    %992 = vmatpush1.msra.mxu0 %v176
    %993 = vmatprep.subr.mxu0 0.0
    %994 = vmatpush1.msra.mxu0 0.0
    %995 = vmatprep.subr.mxu0 0.0
    %996 = vmatpush1.msra.mxu0 0.0
    %997 = vmatprep.subr.mxu0 0.0
    %998 = vmatpush1.msra.mxu0 0.0
    %999 = vmatprep.subr.mxu0 0.0
    %1000 = vmatpush1.msra.mxu0 0.0
    %1001 = vmatprep.subr.mxu0 0.0
    %1002 = vmatpush1.msra.mxu0 0.0
    %1003 = vmatprep.subr.mxu0 0.0
    %1004 = vmatpush1.msra.mxu0 0.0
    %1005 = vmatprep.subr.mxu0 0.0
    %1006 = vmatpush1.msra.mxu0 0.0
    %1007 = vmatprep.subr.mxu0 0.0
    %1008 = vmatpush1.msra.mxu0 0.0
    %1009 = vmatprep.subr.mxu0 0.0
    %1010 = vmatpush1.msra.mxu0 0.0
    %1011 = vmatprep.subr.mxu0 0.0
    %1012 = vmatpush1.msra.mxu0 0.0
    %1013 = vmatprep.subr.mxu0 0.0
    %1014 = vmatpush1.msra.mxu0 0.0
    %1015 = vmatprep.subr.mxu0 0.0
    %1016 = vmatpush1.msra.mxu0 0.0
    %1017 = vmatprep.subr.mxu0 0.0
    %1018 = vmatpush1.msra.mxu0 0.0
    %1019 = vmatprep.subr.mxu0 0.0
    %1020 = vmatpush1.msra.mxu0 0.0
    %1021 = vmatprep.subr.mxu0 0.0
    %1022 = vmatpush1.msra.mxu0 0.0
    %1023 = vmatprep.subr.mxu0 0.0
    %1024 = vmatpush1.msra.mxu0 0.0
    %1025 = vmatprep.subr.mxu0 0.0
    %1026 = vmatpush1.msra.mxu0 0.0
    %1027 = vmatprep.subr.mxu0 0.0
    %1028 = vmatpush1.msra.mxu0 0.0
    %1029 = vmatprep.subr.mxu0 0.0
    %1030 = vmatpush1.msra.mxu0 0.0
    %1031 = vmatprep.subr.mxu0 0.0
    %1032 = vmatpush1.msra.mxu0 0.0
    %1033 = vmatprep.subr.mxu0 0.0
    %1034 = vmatpush1.msra.mxu0 0.0
    %1035 = vmatprep.subr.mxu0 0.0
    %1036 = vmatpush1.msra.mxu0 0.0
    %1037 = vmatprep.subr.mxu0 0.0
    %1038 = vmatpush1.msra.mxu0 0.0
    %1039 = vmatprep.subr.mxu0 0.0
    %1040 = vmatpush1.msra.mxu0 0.0
    %1041 = vmatprep.subr.mxu0 0.0
    %1042 = vmatpush1.msra.mxu0 0.0
    %1043 = vmatprep.subr.mxu0 0.0
    %1044 = vmatpush1.msra.mxu0 0.0
    %1045 = vmatprep.subr.mxu0 0.0
    %1046 = vmatpush1.msra.mxu0 0.0
    %1047 = vmatprep.subr.mxu0 0.0
    %1048 = vmatpush1.msra.mxu0 0.0
    %1049 = vmatprep.mubr.f32.mxu0 0.0
    %1050 = vmatmul.mubr.f32.gmra.mrb[0].mxu0 %v983
    %v1051 = vpop.f32.mrb[0].mxu0
    %v1052 = vadd.f32 0.0, %v1051
    %v1053 = vpop.f32.mrb[0].mxu0
    %1054 = vdwg.mxu0
    %v1055 = vadd.f32 %v155, %v1052
    %v1056 = vmul.f32 %v190, %v1055
    %v1057 = vtanh.pop %v1056
    %v1058 = vmul.f32 %v190, %v1057
    %v1059 = vadd.f32 %v1058, %v191
    %v1060 = vmul.f32 %v1059, %v873
    %1062 = vrot.lane.b32.xlu0 %v1059, 64
    %v1063 = vpop.permute.xlu0 %1062
    %v1065 = vmul.f32 %v1059, %v1063
    %1067 = vrot.lane.b32.xlu0 %v1065, 32
    %v1068 = vpop.permute.xlu0 %1067
    %v1070 = vadd.f32 %v1060, %v1068
    %v1071 = vtanh.pop %v1070
    %1073 = vrot.lane.b32.xlu0 %v1071, 64
    %v1074 = vpop.permute.xlu0 %1073
    %v1076 = vmul.f32 %v1059, %v1074
    %1078 = vrot.lane.b32.xlu0 %v1076, 32
    %v1079 = vpop.permute.xlu0 %1078
    %1082 = vrot.lane.b32.xlu0 %v982, 64
    %v1083 = vpop.permute.xlu0 %1082
    %v1085 = vsel %vm192, %v1079, %v1083
    %v1087 = vsel %vm297, %v1085, 0
    %1089 = vmatprep.subr.mxu0 0.0
    %1090 = vmatpush1.msra.mxu0 %v177
    %1091 = vmatprep.subr.mxu0 0.0
    %1092 = vmatpush1.msra.mxu0 %v178
    %1093 = vmatprep.subr.mxu0 0.0
    %1094 = vmatpush1.msra.mxu0 %v179
    %1095 = vmatprep.subr.mxu0 0.0
    %1096 = vmatpush1.msra.mxu0 %v180
    %1097 = vmatprep.subr.mxu0 0.0
    %1098 = vmatpush1.msra.mxu0 %v181
    %1099 = vmatprep.subr.mxu0 0.0
    %1100 = vmatpush1.msra.mxu0 %v182
    %1101 = vmatprep.subr.mxu0 0.0
    %1102 = vmatpush1.msra.mxu0 %v183
    %1103 = vmatprep.subr.mxu0 0.0
    %1104 = vmatpush1.msra.mxu0 %v184
    %1105 = vmatprep.subr.mxu0 0.0
    %1106 = vmatpush1.msra.mxu0 0.0
    %1107 = vmatprep.subr.mxu0 0.0
    %1108 = vmatpush1.msra.mxu0 0.0
    %1109 = vmatprep.subr.mxu0 0.0
    %1110 = vmatpush1.msra.mxu0 0.0
    %1111 = vmatprep.subr.mxu0 0.0
    %1112 = vmatpush1.msra.mxu0 0.0
    %1113 = vmatprep.subr.mxu0 0.0
    %1114 = vmatpush1.msra.mxu0 0.0
    %1115 = vmatprep.subr.mxu0 0.0
    %1116 = vmatpush1.msra.mxu0 0.0
    %1117 = vmatprep.subr.mxu0 0.0
    %1118 = vmatpush1.msra.mxu0 0.0
    %1119 = vmatprep.subr.mxu0 0.0
    %1120 = vmatpush1.msra.mxu0 0.0
    %1121 = vmatprep.subr.mxu0 0.0
    %1122 = vmatpush1.msra.mxu0 0.0
    %1123 = vmatprep.subr.mxu0 0.0
    %1124 = vmatpush1.msra.mxu0 0.0
    %1125 = vmatprep.subr.mxu0 0.0
    %1126 = vmatpush1.msra.mxu0 0.0
    %1127 = vmatprep.subr.mxu0 0.0
    %1128 = vmatpush1.msra.mxu0 0.0
    %1129 = vmatprep.subr.mxu0 0.0
    %1130 = vmatpush1.msra.mxu0 0.0
    %1131 = vmatprep.subr.mxu0 0.0
    %1132 = vmatpush1.msra.mxu0 0.0
    %1133 = vmatprep.subr.mxu0 0.0
    %1134 = vmatpush1.msra.mxu0 0.0
    %1135 = vmatprep.subr.mxu0 0.0
    %1136 = vmatpush1.msra.mxu0 0.0
    %1137 = vmatprep.subr.mxu0 0.0
    %1138 = vmatpush1.msra.mxu0 0.0
    %1139 = vmatprep.subr.mxu0 0.0
    %1140 = vmatpush1.msra.mxu0 0.0
    %1141 = vmatprep.subr.mxu0 0.0
    %1142 = vmatpush1.msra.mxu0 0.0
    %1143 = vmatprep.subr.mxu0 0.0
    %1144 = vmatpush1.msra.mxu0 0.0
    %1145 = vmatprep.subr.mxu0 0.0
    %1146 = vmatpush1.msra.mxu0 0.0
    %1147 = vmatprep.subr.mxu0 0.0
    %1148 = vmatpush1.msra.mxu0 0.0
    %1149 = vmatprep.subr.mxu0 0.0
    %1150 = vmatpush1.msra.mxu0 0.0
    %1151 = vmatprep.subr.mxu0 0.0
    %1152 = vmatpush1.msra.mxu0 0.0
    %1153 = vmatprep.mubr.f32.mxu0 0.0
    %1154 = vmatmul.mubr.f32.gmra.mrb[0].mxu0 %v1087
    %v1155 = vpop.f32.mrb[0].mxu0
    %v1156 = vadd.f32 %v296, %v1155
    %v1157 = vpop.f32.mrb[0].mxu0
    %1158 = vdwg.mxu0
    %v1159 = vmul.f32 %v190, %v1156
    %v1160 = vtanh.pop %v1159
    %v1161 = vmul.f32 %v190, %v1160
    %v1162 = vadd.f32 %v1161, %v191
    %v1163 = vmul.f32 %v1162, %v976
    %1165 = vrot.lane.b32.xlu0 %v1162, 64
    %v1166 = vpop.permute.xlu0 %1165
    %v1168 = vmul.f32 %v1162, %v1166
    %1170 = vrot.lane.b32.xlu0 %v1168, 32
    %v1171 = vpop.permute.xlu0 %1170
    %v1173 = vadd.f32 %v1163, %v1171
    %v1174 = vtanh.pop %v1173
    %1176 = vrot.lane.b32.xlu0 %v1174, 64
    %v1177 = vpop.permute.xlu0 %1176
    %v1179 = vmul.f32 %v1162, %v1177
    %v1180 = vsel %vm192, %v1079, 0
    %1182 = vmatprep.subr.mxu0 0.0
    %1183 = vmatpush1.msra.mxu0 %v173
    %1184 = vmatprep.subr.mxu0 0.0
    %1185 = vmatpush1.msra.mxu0 %v174
    %1186 = vmatprep.subr.mxu0 0.0
    %1187 = vmatpush1.msra.mxu0 %v175
    %1188 = vmatprep.subr.mxu0 0.0
    %1189 = vmatpush1.msra.mxu0 %v176
    %1190 = vmatprep.subr.mxu0 0.0
    %1191 = vmatpush1.msra.mxu0 0.0
    %1192 = vmatprep.subr.mxu0 0.0
    %1193 = vmatpush1.msra.mxu0 0.0
    %1194 = vmatprep.subr.mxu0 0.0
    %1195 = vmatpush1.msra.mxu0 0.0
    %1196 = vmatprep.subr.mxu0 0.0
    %1197 = vmatpush1.msra.mxu0 0.0
    %1198 = vmatprep.subr.mxu0 0.0
    %1199 = vmatpush1.msra.mxu0 0.0
    %1200 = vmatprep.subr.mxu0 0.0
    %1201 = vmatpush1.msra.mxu0 0.0
    %1202 = vmatprep.subr.mxu0 0.0
    %1203 = vmatpush1.msra.mxu0 0.0
    %1204 = vmatprep.subr.mxu0 0.0
    %1205 = vmatpush1.msra.mxu0 0.0
    %1206 = vmatprep.subr.mxu0 0.0
    %1207 = vmatpush1.msra.mxu0 0.0
    %1208 = vmatprep.subr.mxu0 0.0
    %1209 = vmatpush1.msra.mxu0 0.0
    %1210 = vmatprep.subr.mxu0 0.0
    %1211 = vmatpush1.msra.mxu0 0.0
    %1212 = vmatprep.subr.mxu0 0.0
    %1213 = vmatpush1.msra.mxu0 0.0
    %1214 = vmatprep.subr.mxu0 0.0
    %1215 = vmatpush1.msra.mxu0 0.0
    %1216 = vmatprep.subr.mxu0 0.0
    %1217 = vmatpush1.msra.mxu0 0.0
    %1218 = vmatprep.subr.mxu0 0.0
    %1219 = vmatpush1.msra.mxu0 0.0
    %1220 = vmatprep.subr.mxu0 0.0
    %1221 = vmatpush1.msra.mxu0 0.0
    %1222 = vmatprep.subr.mxu0 0.0
    %1223 = vmatpush1.msra.mxu0 0.0
    %1224 = vmatprep.subr.mxu0 0.0
    %1225 = vmatpush1.msra.mxu0 0.0
    %1226 = vmatprep.subr.mxu0 0.0
    %1227 = vmatpush1.msra.mxu0 0.0
    %1228 = vmatprep.subr.mxu0 0.0
    %1229 = vmatpush1.msra.mxu0 0.0
    %1230 = vmatprep.subr.mxu0 0.0
    %1231 = vmatpush1.msra.mxu0 0.0
    %1232 = vmatprep.subr.mxu0 0.0
    %1233 = vmatpush1.msra.mxu0 0.0
    %1234 = vmatprep.subr.mxu0 0.0
    %1235 = vmatpush1.msra.mxu0 0.0
    %1236 = vmatprep.subr.mxu0 0.0
    %1237 = vmatpush1.msra.mxu0 0.0
    %1238 = vmatprep.subr.mxu0 0.0
    %1239 = vmatpush1.msra.mxu0 0.0
    %1240 = vmatprep.subr.mxu0 0.0
    %1241 = vmatpush1.msra.mxu0 0.0
    %1242 = vmatprep.subr.mxu0 0.0
    %1243 = vmatpush1.msra.mxu0 0.0
    %1244 = vmatprep.subr.mxu0 0.0
    %1245 = vmatpush1.msra.mxu0 0.0
    %1246 = vmatprep.mubr.f32.mxu0 0.0
    %1247 = vmatmul.mubr.f32.gmra.mrb[0].mxu0 %v1180
    %v1248 = vpop.f32.mrb[0].mxu0
    %v1249 = vadd.f32 0.0, %v1248
    %v1250 = vpop.f32.mrb[0].mxu0
    %1251 = vdwg.mxu0
    %v1252 = vadd.f32 %v160, %v1249
    %v1253 = vmul.f32 %v190, %v1252
    %v1254 = vtanh.pop %v1253
    %v1255 = vmul.f32 %v190, %v1254
    %v1256 = vadd.f32 %v1255, %v191
    %v1257 = vmul.f32 %v1256, %v1070
    %1259 = vrot.lane.b32.xlu0 %v1256, 64
    %v1260 = vpop.permute.xlu0 %1259
    %v1262 = vmul.f32 %v1256, %v1260
    %1264 = vrot.lane.b32.xlu0 %v1262, 32
    %v1265 = vpop.permute.xlu0 %1264
    %v1267 = vadd.f32 %v1257, %v1265
    %v1268 = vtanh.pop %v1267
    %1270 = vrot.lane.b32.xlu0 %v1268, 64
    %v1271 = vpop.permute.xlu0 %1270
    %v1273 = vmul.f32 %v1256, %v1271
    %1275 = vrot.lane.b32.xlu0 %v1273, 32
    %v1276 = vpop.permute.xlu0 %1275
    %1279 = vrot.lane.b32.xlu0 %v1179, 64
    %v1280 = vpop.permute.xlu0 %1279
    %v1282 = vsel %vm192, %v1276, %v1280
    %v1284 = vsel %vm297, %v1282, 0
    %1286 = vmatprep.subr.mxu0 0.0
    %1287 = vmatpush1.msra.mxu0 %v177
    %1288 = vmatprep.subr.mxu0 0.0
    %1289 = vmatpush1.msra.mxu0 %v178
    %1290 = vmatprep.subr.mxu0 0.0
    %1291 = vmatpush1.msra.mxu0 %v179
    %1292 = vmatprep.subr.mxu0 0.0
    %1293 = vmatpush1.msra.mxu0 %v180
    %1294 = vmatprep.subr.mxu0 0.0
    %1295 = vmatpush1.msra.mxu0 %v181
    %1296 = vmatprep.subr.mxu0 0.0
    %1297 = vmatpush1.msra.mxu0 %v182
    %1298 = vmatprep.subr.mxu0 0.0
    %1299 = vmatpush1.msra.mxu0 %v183
    %1300 = vmatprep.subr.mxu0 0.0
    %1301 = vmatpush1.msra.mxu0 %v184
    %1302 = vmatprep.subr.mxu0 0.0
    %1303 = vmatpush1.msra.mxu0 0.0
    %1304 = vmatprep.subr.mxu0 0.0
    %1305 = vmatpush1.msra.mxu0 0.0
    %1306 = vmatprep.subr.mxu0 0.0
    %1307 = vmatpush1.msra.mxu0 0.0
    %1308 = vmatprep.subr.mxu0 0.0
    %1309 = vmatpush1.msra.mxu0 0.0
    %1310 = vmatprep.subr.mxu0 0.0
    %1311 = vmatpush1.msra.mxu0 0.0
    %1312 = vmatprep.subr.mxu0 0.0
    %1313 = vmatpush1.msra.mxu0 0.0
    %1314 = vmatprep.subr.mxu0 0.0
    %1315 = vmatpush1.msra.mxu0 0.0
    %1316 = vmatprep.subr.mxu0 0.0
    %1317 = vmatpush1.msra.mxu0 0.0
    %1318 = vmatprep.subr.mxu0 0.0
    %1319 = vmatpush1.msra.mxu0 0.0
    %1320 = vmatprep.subr.mxu0 0.0
    %1321 = vmatpush1.msra.mxu0 0.0
    %1322 = vmatprep.subr.mxu0 0.0
    %1323 = vmatpush1.msra.mxu0 0.0
    %1324 = vmatprep.subr.mxu0 0.0
    %1325 = vmatpush1.msra.mxu0 0.0
    %1326 = vmatprep.subr.mxu0 0.0
    %1327 = vmatpush1.msra.mxu0 0.0
    %1328 = vmatprep.subr.mxu0 0.0
    %1329 = vmatpush1.msra.mxu0 0.0
    %1330 = vmatprep.subr.mxu0 0.0
    %1331 = vmatpush1.msra.mxu0 0.0
    %1332 = vmatprep.subr.mxu0 0.0
    %1333 = vmatpush1.msra.mxu0 0.0
    %1334 = vmatprep.subr.mxu0 0.0
    %1335 = vmatpush1.msra.mxu0 0.0
    %1336 = vmatprep.subr.mxu0 0.0
    %1337 = vmatpush1.msra.mxu0 0.0
    %1338 = vmatprep.subr.mxu0 0.0
    %1339 = vmatpush1.msra.mxu0 0.0
    %1340 = vmatprep.subr.mxu0 0.0
    %1341 = vmatpush1.msra.mxu0 0.0
    %1342 = vmatprep.subr.mxu0 0.0
    %1343 = vmatpush1.msra.mxu0 0.0
    %1344 = vmatprep.subr.mxu0 0.0
    %1345 = vmatpush1.msra.mxu0 0.0
    %1346 = vmatprep.subr.mxu0 0.0
    %1347 = vmatpush1.msra.mxu0 0.0
    %1348 = vmatprep.subr.mxu0 0.0
    %1349 = vmatpush1.msra.mxu0 0.0
    %1350 = vmatprep.mubr.f32.mxu0 0.0
    %1351 = vmatmul.mubr.f32.gmra.mrb[0].mxu0 %v1284
    %v1352 = vpop.f32.mrb[0].mxu0
    %v1353 = vadd.f32 %v296, %v1352
    %v1354 = vpop.f32.mrb[0].mxu0
    %1355 = vdwg.mxu0
    %v1356 = vmul.f32 %v190, %v1353
    %v1357 = vtanh.pop %v1356
    %v1358 = vmul.f32 %v190, %v1357
    %v1359 = vadd.f32 %v1358, %v191
    %v1360 = vmul.f32 %v1359, %v1173
    %1362 = vrot.lane.b32.xlu0 %v1359, 64
    %v1363 = vpop.permute.xlu0 %1362
    %v1365 = vmul.f32 %v1359, %v1363
    %1367 = vrot.lane.b32.xlu0 %v1365, 32
    %v1368 = vpop.permute.xlu0 %1367
    %v1370 = vadd.f32 %v1360, %v1368
    %v1371 = vtanh.pop %v1370
    %1373 = vrot.lane.b32.xlu0 %v1371, 64
    %v1374 = vpop.permute.xlu0 %1373
    %v1376 = vmul.f32 %v1359, %v1374
    %v1377 = vsel %vm192, %v1276, 0
    %1379 = vmatprep.subr.mxu0 0.0
    %1380 = vmatpush1.msra.mxu0 %v173
    %1381 = vmatprep.subr.mxu0 0.0
    %1382 = vmatpush1.msra.mxu0 %v174
    %1383 = vmatprep.subr.mxu0 0.0
    %1384 = vmatpush1.msra.mxu0 %v175
    %1385 = vmatprep.subr.mxu0 0.0
    %1386 = vmatpush1.msra.mxu0 %v176
    %1387 = vmatprep.subr.mxu0 0.0
    %1388 = vmatpush1.msra.mxu0 0.0
    %1389 = vmatprep.subr.mxu0 0.0
    %1390 = vmatpush1.msra.mxu0 0.0
    %1391 = vmatprep.subr.mxu0 0.0
    %1392 = vmatpush1.msra.mxu0 0.0
    %1393 = vmatprep.subr.mxu0 0.0
    %1394 = vmatpush1.msra.mxu0 0.0
    %1395 = vmatprep.subr.mxu0 0.0
    %1396 = vmatpush1.msra.mxu0 0.0
    %1397 = vmatprep.subr.mxu0 0.0
    %1398 = vmatpush1.msra.mxu0 0.0
    %1399 = vmatprep.subr.mxu0 0.0
    %1400 = vmatpush1.msra.mxu0 0.0
    %1401 = vmatprep.subr.mxu0 0.0
    %1402 = vmatpush1.msra.mxu0 0.0
    %1403 = vmatprep.subr.mxu0 0.0
    %1404 = vmatpush1.msra.mxu0 0.0
    %1405 = vmatprep.subr.mxu0 0.0
    %1406 = vmatpush1.msra.mxu0 0.0
    %1407 = vmatprep.subr.mxu0 0.0
    %1408 = vmatpush1.msra.mxu0 0.0
    %1409 = vmatprep.subr.mxu0 0.0
    %1410 = vmatpush1.msra.mxu0 0.0
    %1411 = vmatprep.subr.mxu0 0.0
    %1412 = vmatpush1.msra.mxu0 0.0
    %1413 = vmatprep.subr.mxu0 0.0
    %1414 = vmatpush1.msra.mxu0 0.0
    %1415 = vmatprep.subr.mxu0 0.0
    %1416 = vmatpush1.msra.mxu0 0.0
    %1417 = vmatprep.subr.mxu0 0.0
    %1418 = vmatpush1.msra.mxu0 0.0
    %1419 = vmatprep.subr.mxu0 0.0
    %1420 = vmatpush1.msra.mxu0 0.0
    %1421 = vmatprep.subr.mxu0 0.0
    %1422 = vmatpush1.msra.mxu0 0.0
    %1423 = vmatprep.subr.mxu0 0.0
    %1424 = vmatpush1.msra.mxu0 0.0
    %1425 = vmatprep.subr.mxu0 0.0
    %1426 = vmatpush1.msra.mxu0 0.0
    %1427 = vmatprep.subr.mxu0 0.0
    %1428 = vmatpush1.msra.mxu0 0.0
    %1429 = vmatprep.subr.mxu0 0.0
    %1430 = vmatpush1.msra.mxu0 0.0
    %1431 = vmatprep.subr.mxu0 0.0
    %1432 = vmatpush1.msra.mxu0 0.0
    %1433 = vmatprep.subr.mxu0 0.0
    %1434 = vmatpush1.msra.mxu0 0.0
    %1435 = vmatprep.subr.mxu0 0.0
    %1436 = vmatpush1.msra.mxu0 0.0
    %1437 = vmatprep.subr.mxu0 0.0
    %1438 = vmatpush1.msra.mxu0 0.0
    %1439 = vmatprep.subr.mxu0 0.0
    %1440 = vmatpush1.msra.mxu0 0.0
    %1441 = vmatprep.subr.mxu0 0.0
    %1442 = vmatpush1.msra.mxu0 0.0
    %1443 = vmatprep.mubr.f32.mxu0 0.0
    %1444 = vmatmul.mubr.f32.gmra.mrb[0].mxu0 %v1377
    %v1445 = vpop.f32.mrb[0].mxu0
    %v1446 = vadd.f32 0.0, %v1445
    %v1447 = vpop.f32.mrb[0].mxu0
    %1448 = vdwg.mxu0
    %v1449 = vadd.f32 %v165, %v1446
    %v1450 = vmul.f32 %v190, %v1449
    %v1451 = vtanh.pop %v1450
    %v1452 = vmul.f32 %v190, %v1451
    %v1453 = vadd.f32 %v1452, %v191
    %v1454 = vmul.f32 %v1453, %v1267
    %1456 = vrot.lane.b32.xlu0 %v1453, 64
    %v1457 = vpop.permute.xlu0 %1456
    %v1459 = vmul.f32 %v1453, %v1457
    %1461 = vrot.lane.b32.xlu0 %v1459, 32
    %v1462 = vpop.permute.xlu0 %1461
    %v1464 = vadd.f32 %v1454, %v1462
    %v1465 = vtanh.pop %v1464
    %1467 = vrot.lane.b32.xlu0 %v1465, 64
    %v1468 = vpop.permute.xlu0 %1467
    %v1470 = vmul.f32 %v1453, %v1468
    %1472 = vrot.lane.b32.xlu0 %v1470, 32
    %v1473 = vpop.permute.xlu0 %1472
    %1476 = vrot.lane.b32.xlu0 %v1376, 64
    %v1477 = vpop.permute.xlu0 %1476
    %v1479 = vsel %vm192, %v1473, %v1477
    %v1481 = vsel %vm297, %v1479, 0
    %1483 = vmatprep.subr.mxu0 0.0
    %1484 = vmatpush1.msra.mxu0 %v177
    %1485 = vmatprep.subr.mxu0 0.0
    %1486 = vmatpush1.msra.mxu0 %v178
    %1487 = vmatprep.subr.mxu0 0.0
    %1488 = vmatpush1.msra.mxu0 %v179
    %1489 = vmatprep.subr.mxu0 0.0
    %1490 = vmatpush1.msra.mxu0 %v180
    %1491 = vmatprep.subr.mxu0 0.0
    %1492 = vmatpush1.msra.mxu0 %v181
    %1493 = vmatprep.subr.mxu0 0.0
    %1494 = vmatpush1.msra.mxu0 %v182
    %1495 = vmatprep.subr.mxu0 0.0
    %1496 = vmatpush1.msra.mxu0 %v183
    %1497 = vmatprep.subr.mxu0 0.0
    %1498 = vmatpush1.msra.mxu0 %v184
    %1499 = vmatprep.subr.mxu0 0.0
    %1500 = vmatpush1.msra.mxu0 0.0
    %1501 = vmatprep.subr.mxu0 0.0
    %1502 = vmatpush1.msra.mxu0 0.0
    %1503 = vmatprep.subr.mxu0 0.0
    %1504 = vmatpush1.msra.mxu0 0.0
    %1505 = vmatprep.subr.mxu0 0.0
    %1506 = vmatpush1.msra.mxu0 0.0
    %1507 = vmatprep.subr.mxu0 0.0
    %1508 = vmatpush1.msra.mxu0 0.0
    %1509 = vmatprep.subr.mxu0 0.0
    %1510 = vmatpush1.msra.mxu0 0.0
    %1511 = vmatprep.subr.mxu0 0.0
    %1512 = vmatpush1.msra.mxu0 0.0
    %1513 = vmatprep.subr.mxu0 0.0
    %1514 = vmatpush1.msra.mxu0 0.0
    %1515 = vmatprep.subr.mxu0 0.0
    %1516 = vmatpush1.msra.mxu0 0.0
    %1517 = vmatprep.subr.mxu0 0.0
    %1518 = vmatpush1.msra.mxu0 0.0
    %1519 = vmatprep.subr.mxu0 0.0
    %1520 = vmatpush1.msra.mxu0 0.0
    %1521 = vmatprep.subr.mxu0 0.0
    %1522 = vmatpush1.msra.mxu0 0.0
    %1523 = vmatprep.subr.mxu0 0.0
    %1524 = vmatpush1.msra.mxu0 0.0
    %1525 = vmatprep.subr.mxu0 0.0
    %1526 = vmatpush1.msra.mxu0 0.0
    %1527 = vmatprep.subr.mxu0 0.0
    %1528 = vmatpush1.msra.mxu0 0.0
    %1529 = vmatprep.subr.mxu0 0.0
    %1530 = vmatpush1.msra.mxu0 0.0
    %1531 = vmatprep.subr.mxu0 0.0
    %1532 = vmatpush1.msra.mxu0 0.0
    %1533 = vmatprep.subr.mxu0 0.0
    %1534 = vmatpush1.msra.mxu0 0.0
    %1535 = vmatprep.subr.mxu0 0.0
    %1536 = vmatpush1.msra.mxu0 0.0
    %1537 = vmatprep.subr.mxu0 0.0
    %1538 = vmatpush1.msra.mxu0 0.0
    %1539 = vmatprep.subr.mxu0 0.0
    %1540 = vmatpush1.msra.mxu0 0.0
    %1541 = vmatprep.subr.mxu0 0.0
    %1542 = vmatpush1.msra.mxu0 0.0
    %1543 = vmatprep.subr.mxu0 0.0
    %1544 = vmatpush1.msra.mxu0 0.0
    %1545 = vmatprep.subr.mxu0 0.0
    %1546 = vmatpush1.msra.mxu0 0.0
    %1547 = vmatprep.mubr.f32.mxu0 0.0
    %1548 = vmatmul.mubr.f32.gmra.mrb[0].mxu0 %v1481
    %v1549 = vpop.f32.mrb[0].mxu0
    %v1550 = vadd.f32 %v296, %v1549
    %v1551 = vpop.f32.mrb[0].mxu0
    %1552 = vdwg.mxu0
    %v1553 = vmul.f32 %v190, %v1550
    %v1554 = vtanh.pop %v1553
    %v1555 = vmul.f32 %v190, %v1554
    %v1556 = vadd.f32 %v1555, %v191
    %v1557 = vmul.f32 %v1556, %v1370
    %1559 = vrot.lane.b32.xlu0 %v1556, 64
    %v1560 = vpop.permute.xlu0 %1559
    %v1562 = vmul.f32 %v1556, %v1560
    %1564 = vrot.lane.b32.xlu0 %v1562, 32
    %v1565 = vpop.permute.xlu0 %1564
    %v1567 = vadd.f32 %v1557, %v1565
    %v1568 = vtanh.pop %v1567
    %1570 = vrot.lane.b32.xlu0 %v1568, 64
    %v1571 = vpop.permute.xlu0 %1570
    %v1573 = vmul.f32 %v1556, %v1571
    %v1574 = vsel %vm192, %v1473, 0
    %1576 = vmatprep.subr.mxu0 0.0
    %1577 = vmatpush1.msra.mxu0 %v173
    %1578 = vmatprep.subr.mxu0 0.0
    %1579 = vmatpush1.msra.mxu0 %v174
    %1580 = vmatprep.subr.mxu0 0.0
    %1581 = vmatpush1.msra.mxu0 %v175
    %1582 = vmatprep.subr.mxu0 0.0
    %1583 = vmatpush1.msra.mxu0 %v176
    %1584 = vmatprep.subr.mxu0 0.0
    %1585 = vmatpush1.msra.mxu0 0.0
    %1586 = vmatprep.subr.mxu0 0.0
    %1587 = vmatpush1.msra.mxu0 0.0
    %1588 = vmatprep.subr.mxu0 0.0
    %1589 = vmatpush1.msra.mxu0 0.0
    %1590 = vmatprep.subr.mxu0 0.0
    %1591 = vmatpush1.msra.mxu0 0.0
    %1592 = vmatprep.subr.mxu0 0.0
    %1593 = vmatpush1.msra.mxu0 0.0
    %1594 = vmatprep.subr.mxu0 0.0
    %1595 = vmatpush1.msra.mxu0 0.0
    %1596 = vmatprep.subr.mxu0 0.0
    %1597 = vmatpush1.msra.mxu0 0.0
    %1598 = vmatprep.subr.mxu0 0.0
    %1599 = vmatpush1.msra.mxu0 0.0
    %1600 = vmatprep.subr.mxu0 0.0
    %1601 = vmatpush1.msra.mxu0 0.0
    %1602 = vmatprep.subr.mxu0 0.0
    %1603 = vmatpush1.msra.mxu0 0.0
    %1604 = vmatprep.subr.mxu0 0.0
    %1605 = vmatpush1.msra.mxu0 0.0
    %1606 = vmatprep.subr.mxu0 0.0
    %1607 = vmatpush1.msra.mxu0 0.0
    %1608 = vmatprep.subr.mxu0 0.0
    %1609 = vmatpush1.msra.mxu0 0.0
    %1610 = vmatprep.subr.mxu0 0.0
    %1611 = vmatpush1.msra.mxu0 0.0
    %1612 = vmatprep.subr.mxu0 0.0
    %1613 = vmatpush1.msra.mxu0 0.0
    %1614 = vmatprep.subr.mxu0 0.0
    %1615 = vmatpush1.msra.mxu0 0.0
    %1616 = vmatprep.subr.mxu0 0.0
    %1617 = vmatpush1.msra.mxu0 0.0
    %1618 = vmatprep.subr.mxu0 0.0
    %1619 = vmatpush1.msra.mxu0 0.0
    %1620 = vmatprep.subr.mxu0 0.0
    %1621 = vmatpush1.msra.mxu0 0.0
    %1622 = vmatprep.subr.mxu0 0.0
    %1623 = vmatpush1.msra.mxu0 0.0
    %1624 = vmatprep.subr.mxu0 0.0
    %1625 = vmatpush1.msra.mxu0 0.0
    %1626 = vmatprep.subr.mxu0 0.0
    %1627 = vmatpush1.msra.mxu0 0.0
    %1628 = vmatprep.subr.mxu0 0.0
    %1629 = vmatpush1.msra.mxu0 0.0
    %1630 = vmatprep.subr.mxu0 0.0
    %1631 = vmatpush1.msra.mxu0 0.0
    %1632 = vmatprep.subr.mxu0 0.0
    %1633 = vmatpush1.msra.mxu0 0.0
    %1634 = vmatprep.subr.mxu0 0.0
    %1635 = vmatpush1.msra.mxu0 0.0
    %1636 = vmatprep.subr.mxu0 0.0
    %1637 = vmatpush1.msra.mxu0 0.0
    %1638 = vmatprep.subr.mxu0 0.0
    %1639 = vmatpush1.msra.mxu0 0.0
    %1640 = vmatprep.mubr.f32.mxu0 0.0
    %1641 = vmatmul.mubr.f32.gmra.mrb[0].mxu0 %v1574
    %v1642 = vpop.f32.mrb[0].mxu0
    %v1643 = vadd.f32 0.0, %v1642
    %v1644 = vpop.f32.mrb[0].mxu0
    %1645 = vdwg.mxu0
    %v1646 = vadd.f32 %v170, %v1643
    %v1647 = vmul.f32 %v190, %v1646
    %v1648 = vtanh.pop %v1647
    %v1649 = vmul.f32 %v190, %v1648
    %v1650 = vadd.f32 %v1649, %v191
    %v1651 = vmul.f32 %v1650, %v1464
    %1653 = vrot.lane.b32.xlu0 %v1650, 64
    %v1654 = vpop.permute.xlu0 %1653
    %v1656 = vmul.f32 %v1650, %v1654
    %1658 = vrot.lane.b32.xlu0 %v1656, 32
    %v1659 = vpop.permute.xlu0 %1658
    %v1661 = vadd.f32 %v1651, %v1659
    %v1662 = vtanh.pop %v1661
    %1664 = vrot.lane.b32.xlu0 %v1662, 64
    %v1665 = vpop.permute.xlu0 %1664
    %v1667 = vmul.f32 %v1650, %v1665
    %1669 = vrot.lane.b32.xlu0 %v1667, 32
    %v1670 = vpop.permute.xlu0 %1669
    %1673 = vrot.lane.b32.xlu0 %v1573, 64
    %v1674 = vpop.permute.xlu0 %1673
    %v1676 = vsel %vm192, %v1670, %v1674
    %v1678 = vsel %vm297, %v1676, 0
    %1680 = vmatprep.subr.mxu0 0.0
    %1681 = vmatpush1.msra.mxu0 %v177
    %1682 = vmatprep.subr.mxu0 0.0
    %1683 = vmatpush1.msra.mxu0 %v178
    %1684 = vmatprep.subr.mxu0 0.0
    %1685 = vmatpush1.msra.mxu0 %v179
    %1686 = vmatprep.subr.mxu0 0.0
    %1687 = vmatpush1.msra.mxu0 %v180
    %1688 = vmatprep.subr.mxu0 0.0
    %1689 = vmatpush1.msra.mxu0 %v181
    %1690 = vmatprep.subr.mxu0 0.0
    %1691 = vmatpush1.msra.mxu0 %v182
    %1692 = vmatprep.subr.mxu0 0.0
    %1693 = vmatpush1.msra.mxu0 %v183
    %1694 = vmatprep.subr.mxu0 0.0
    %1695 = vmatpush1.msra.mxu0 %v184
    %1696 = vmatprep.subr.mxu0 0.0
    %1697 = vmatpush1.msra.mxu0 0.0
    %1698 = vmatprep.subr.mxu0 0.0
    %1699 = vmatpush1.msra.mxu0 0.0
    %1700 = vmatprep.subr.mxu0 0.0
    %1701 = vmatpush1.msra.mxu0 0.0
    %1702 = vmatprep.subr.mxu0 0.0
    %1703 = vmatpush1.msra.mxu0 0.0
    %1704 = vmatprep.subr.mxu0 0.0
    %1705 = vmatpush1.msra.mxu0 0.0
    %1706 = vmatprep.subr.mxu0 0.0
    %1707 = vmatpush1.msra.mxu0 0.0
    %1708 = vmatprep.subr.mxu0 0.0
    %1709 = vmatpush1.msra.mxu0 0.0
    %1710 = vmatprep.subr.mxu0 0.0
    %1711 = vmatpush1.msra.mxu0 0.0
    %1712 = vmatprep.subr.mxu0 0.0
    %1713 = vmatpush1.msra.mxu0 0.0
    %1714 = vmatprep.subr.mxu0 0.0
    %1715 = vmatpush1.msra.mxu0 0.0
    %1716 = vmatprep.subr.mxu0 0.0
    %1717 = vmatpush1.msra.mxu0 0.0
    %1718 = vmatprep.subr.mxu0 0.0
    %1719 = vmatpush1.msra.mxu0 0.0
    %1720 = vmatprep.subr.mxu0 0.0
    %1721 = vmatpush1.msra.mxu0 0.0
    %1722 = vmatprep.subr.mxu0 0.0
    %1723 = vmatpush1.msra.mxu0 0.0
    %1724 = vmatprep.subr.mxu0 0.0
    %1725 = vmatpush1.msra.mxu0 0.0
    %1726 = vmatprep.subr.mxu0 0.0
    %1727 = vmatpush1.msra.mxu0 0.0
    %1728 = vmatprep.subr.mxu0 0.0
    %1729 = vmatpush1.msra.mxu0 0.0
    %1730 = vmatprep.subr.mxu0 0.0
    %1731 = vmatpush1.msra.mxu0 0.0
    %1732 = vmatprep.subr.mxu0 0.0
    %1733 = vmatpush1.msra.mxu0 0.0
    %1734 = vmatprep.subr.mxu0 0.0
    %1735 = vmatpush1.msra.mxu0 0.0
    %1736 = vmatprep.subr.mxu0 0.0
    %1737 = vmatpush1.msra.mxu0 0.0
    %1738 = vmatprep.subr.mxu0 0.0
    %1739 = vmatpush1.msra.mxu0 0.0
    %1740 = vmatprep.subr.mxu0 0.0
    %1741 = vmatpush1.msra.mxu0 0.0
    %1742 = vmatprep.subr.mxu0 0.0
    %1743 = vmatpush1.msra.mxu0 0.0
    %1744 = vmatprep.mubr.f32.mxu0 0.0
    %1745 = vmatmul.mubr.f32.gmra.mrb[0].mxu0 %v1678
    %v1746 = vpop.f32.mrb[0].mxu0
    %v1747 = vadd.f32 %v296, %v1746
    %v1748 = vpop.f32.mrb[0].mxu0
    %1749 = vdwg.mxu0
    %v1750 = vmul.f32 %v190, %v1747
    %v1751 = vtanh.pop %v1750
    %v1752 = vmul.f32 %v190, %v1751
    %v1753 = vadd.f32 %v1752, %v191
    %v1754 = vmul.f32 %v1753, %v1567
    %1756 = vrot.lane.b32.xlu0 %v1753, 64
    %v1757 = vpop.permute.xlu0 %1756
    %v1759 = vmul.f32 %v1753, %v1757
    %1761 = vrot.lane.b32.xlu0 %v1759, 32
    %v1762 = vpop.permute.xlu0 %1761
    %v1764 = vadd.f32 %v1754, %v1762
    %v1765 = vtanh.pop %v1764
    %1767 = vrot.lane.b32.xlu0 %v1765, 64
    %v1768 = vpop.permute.xlu0 %1767
    %v1770 = vmul.f32 %v1753, %v1768
    %v1771 = vld [vmem:[#allocation2 + $0x70] sm:$0xff]
    %v1772 = vld [vmem:[#allocation2 + $0x78] sm:$0xff]
    %v1773 = vld [vmem:[#allocation2 + $0x80] sm:$0xff]
    %v1774 = vld [vmem:[#allocation2 + $0x88] sm:$0xff]
    %v1775 = vlaneseq
    %v1776 = vshrl.u32 %v1775, 7
    %v1777 = vsub.s32 2, %v1776
    %v1778 = vrot.slane %v28, %v1777
    %1780 = vrot.lane.b32.xlu0 %v1770, 32
    %v1781 = vpop.permute.xlu0 %1780
    %v1782 = vsel %vm192, %v1781, 0
    %1784 = vmatprep.subr.mxu0 0.0
    %1785 = vmatpush1.msra.mxu0 %v1771
    %1786 = vmatprep.subr.mxu0 0.0
    %1787 = vmatpush1.msra.mxu0 %v1772
    %1788 = vmatprep.subr.mxu0 0.0
    %1789 = vmatpush1.msra.mxu0 %v1773
    %1790 = vmatprep.subr.mxu0 0.0
    %1791 = vmatpush1.msra.mxu0 %v1774
    %1792 = vmatprep.subr.mxu0 0.0
    %1793 = vmatpush1.msra.mxu0 0.0
    %1794 = vmatprep.subr.mxu0 0.0
    %1795 = vmatpush1.msra.mxu0 0.0
    %1796 = vmatprep.subr.mxu0 0.0
    %1797 = vmatpush1.msra.mxu0 0.0
    %1798 = vmatprep.subr.mxu0 0.0
    %1799 = vmatpush1.msra.mxu0 0.0
    %1800 = vmatprep.subr.mxu0 0.0
    %1801 = vmatpush1.msra.mxu0 0.0
    %1802 = vmatprep.subr.mxu0 0.0
    %1803 = vmatpush1.msra.mxu0 0.0
    %1804 = vmatprep.subr.mxu0 0.0
    %1805 = vmatpush1.msra.mxu0 0.0
    %1806 = vmatprep.subr.mxu0 0.0
    %1807 = vmatpush1.msra.mxu0 0.0
    %1808 = vmatprep.subr.mxu0 0.0
    %1809 = vmatpush1.msra.mxu0 0.0
    %1810 = vmatprep.subr.mxu0 0.0
    %1811 = vmatpush1.msra.mxu0 0.0
    %1812 = vmatprep.subr.mxu0 0.0
    %1813 = vmatpush1.msra.mxu0 0.0
    %1814 = vmatprep.subr.mxu0 0.0
    %1815 = vmatpush1.msra.mxu0 0.0
    %1816 = vmatprep.subr.mxu0 0.0
    %1817 = vmatpush1.msra.mxu0 0.0
    %1818 = vmatprep.subr.mxu0 0.0
    %1819 = vmatpush1.msra.mxu0 0.0
    %1820 = vmatprep.subr.mxu0 0.0
    %1821 = vmatpush1.msra.mxu0 0.0
    %1822 = vmatprep.subr.mxu0 0.0
    %1823 = vmatpush1.msra.mxu0 0.0
    %1824 = vmatprep.subr.mxu0 0.0
    %1825 = vmatpush1.msra.mxu0 0.0
    %1826 = vmatprep.subr.mxu0 0.0
    %1827 = vmatpush1.msra.mxu0 0.0
    %1828 = vmatprep.subr.mxu0 0.0
    %1829 = vmatpush1.msra.mxu0 0.0
    %1830 = vmatprep.subr.mxu0 0.0
    %1831 = vmatpush1.msra.mxu0 0.0
    %1832 = vmatprep.subr.mxu0 0.0
    %1833 = vmatpush1.msra.mxu0 0.0
    %1834 = vmatprep.subr.mxu0 0.0
    %1835 = vmatpush1.msra.mxu0 0.0
    %1836 = vmatprep.subr.mxu0 0.0
    %1837 = vmatpush1.msra.mxu0 0.0
    %1838 = vmatprep.subr.mxu0 0.0
    %1839 = vmatpush1.msra.mxu0 0.0
    %1840 = vmatprep.subr.mxu0 0.0
    %1841 = vmatpush1.msra.mxu0 0.0
    %1842 = vmatprep.subr.mxu0 0.0
    %1843 = vmatpush1.msra.mxu0 0.0
    %1844 = vmatprep.subr.mxu0 0.0
    %1845 = vmatpush1.msra.mxu0 0.0
    %1846 = vmatprep.subr.mxu0 0.0
    %1847 = vmatpush1.msra.mxu0 0.0
    %1848 = vmatprep.mubr.f32.mxu0 0.0
    %1849 = vmatmul.mubr.f32.gmra.mrb[0].mxu0 %v1782
    %v1850 = vpop.f32.mrb[0].mxu0
    %v1851 = vadd.f32 %v1778, %v1850
    %v1852 = vpop.f32.mrb[0].mxu0
    %1853 = vdwg.mxu0
    %v1854 = vmax.f32 %v1851, 0.0
    %v1855 = vld [vmem:[#allocation2 + $0x90] sm:$0xff]
    %v1856 = vld [vmem:[#allocation2 + $0x98] sm:$0xff]
    %v1857 = vld [vmem:[#allocation2 + $0xa0] sm:$0xff]
    %v1858 = vld [vmem:[#allocation2 + $0xa8] sm:$0xff]
    %v1859 = vld [vmem:[#allocation2 + $0xb0] sm:$0xff]
    %v1860 = vld [vmem:[#allocation2 + $0xb8] sm:$0xff]
    %v1861 = vld [vmem:[#allocation2 + $0xc0] sm:$0xff]
    %v1862 = vld [vmem:[#allocation2 + $0xc8] sm:$0xff]
    %v1863 = vld [vmem:[#allocation2 + $0xd0] sm:$0xff]
    %v1864 = vld [vmem:[#allocation2 + $0xd8] sm:$0xff]
    %v1865 = vld [vmem:[#allocation2 + $0xe0] sm:$0xff]
    %v1866 = vld [vmem:[#allocation2 + $0xe8] sm:$0xff]
    %v1867 = vld [vmem:[#allocation2 + $0xf0] sm:$0xff]
    %v1868 = vld [vmem:[#allocation2 + $0xf8] sm:$0xff]
    %v1869 = vld [vmem:[#allocation2 + $0x100] sm:$0xff]
    %v1870 = vld [vmem:[#allocation2 + $0x108] sm:$0xff]
    %v1871 = vlaneseq
    %v1872 = vshrl.u32 %v1871, 7
    %v1873 = vsub.s32 3, %v1872
    %v1874 = vrot.slane %v28, %v1873
    %1875 = vmatprep.subr.mxu0 0.0
    %1876 = vmatpush1.msra.mxu0 %v1855
    %1877 = vmatprep.subr.mxu0 0.0
    %1878 = vmatpush1.msra.mxu0 %v1856
    %1879 = vmatprep.subr.mxu0 0.0
    %1880 = vmatpush1.msra.mxu0 %v1857
    %1881 = vmatprep.subr.mxu0 0.0
    %1882 = vmatpush1.msra.mxu0 %v1858
    %1883 = vmatprep.subr.mxu0 0.0
    %1884 = vmatpush1.msra.mxu0 %v1859
    %1885 = vmatprep.subr.mxu0 0.0
    %1886 = vmatpush1.msra.mxu0 %v1860
    %1887 = vmatprep.subr.mxu0 0.0
    %1888 = vmatpush1.msra.mxu0 %v1861
    %1889 = vmatprep.subr.mxu0 0.0
    %1890 = vmatpush1.msra.mxu0 %v1862
    %1891 = vmatprep.subr.mxu0 0.0
    %1892 = vmatpush1.msra.mxu0 %v1863
    %1893 = vmatprep.subr.mxu0 0.0
    %1894 = vmatpush1.msra.mxu0 %v1864
    %1895 = vmatprep.subr.mxu0 0.0
    %1896 = vmatpush1.msra.mxu0 %v1865
    %1897 = vmatprep.subr.mxu0 0.0
    %1898 = vmatpush1.msra.mxu0 %v1866
    %1899 = vmatprep.subr.mxu0 0.0
    %1900 = vmatpush1.msra.mxu0 %v1867
    %1901 = vmatprep.subr.mxu0 0.0
    %1902 = vmatpush1.msra.mxu0 %v1868
    %1903 = vmatprep.subr.mxu0 0.0
    %1904 = vmatpush1.msra.mxu0 %v1869
    %1905 = vmatprep.subr.mxu0 0.0
    %1906 = vmatpush1.msra.mxu0 %v1870
    %1907 = vmatprep.subr.mxu0 0.0
    %1908 = vmatpush1.msra.mxu0 0.0
    %1909 = vmatprep.subr.mxu0 0.0
    %1910 = vmatpush1.msra.mxu0 0.0
    %1911 = vmatprep.subr.mxu0 0.0
    %1912 = vmatpush1.msra.mxu0 0.0
    %1913 = vmatprep.subr.mxu0 0.0
    %1914 = vmatpush1.msra.mxu0 0.0
    %1915 = vmatprep.subr.mxu0 0.0
    %1916 = vmatpush1.msra.mxu0 0.0
    %1917 = vmatprep.subr.mxu0 0.0
    %1918 = vmatpush1.msra.mxu0 0.0
    %1919 = vmatprep.subr.mxu0 0.0
    %1920 = vmatpush1.msra.mxu0 0.0
    %1921 = vmatprep.subr.mxu0 0.0
    %1922 = vmatpush1.msra.mxu0 0.0
    %1923 = vmatprep.subr.mxu0 0.0
    %1924 = vmatpush1.msra.mxu0 0.0
    %1925 = vmatprep.subr.mxu0 0.0
    %1926 = vmatpush1.msra.mxu0 0.0
    %1927 = vmatprep.subr.mxu0 0.0
    %1928 = vmatpush1.msra.mxu0 0.0
    %1929 = vmatprep.subr.mxu0 0.0
    %1930 = vmatpush1.msra.mxu0 0.0
    %1931 = vmatprep.subr.mxu0 0.0
    %1932 = vmatpush1.msra.mxu0 0.0
    %1933 = vmatprep.subr.mxu0 0.0
    %1934 = vmatpush1.msra.mxu0 0.0
    %1935 = vmatprep.subr.mxu0 0.0
    %1936 = vmatpush1.msra.mxu0 0.0
    %1937 = vmatprep.subr.mxu0 0.0
    %1938 = vmatpush1.msra.mxu0 0.0
    %1939 = vmatprep.mubr.f32.mxu0 0.0
    %1940 = vmatmul.mubr.f32.gmra.mrb[0].mxu0 %v1854
    %v1941 = vpop.f32.mrb[0].mxu0
    %v1942 = vadd.f32 %v1874, %v1941
    %v1943 = vpop.f32.mrb[0].mxu0
    %1944 = vdwg.mxu0
    %1945 = vst [vmem:[%s3] sm:$0xff] %v1942
    // Predicated region
    $region18: #{lstm_model_forward.1} parent=1 // pred_check
      _
    $region19: #{lstm_model_forward.1} parent=1 // pred_check_branch
      %1947 = sbr.rel (0) target = $region21
    $region20: #{lstm_model_forward.1} parent=1 // pred_region
      _
    $region21: #{lstm_model_forward.1} parent=1 // pred_fallthru
      _
    // Predicated region
    $region22: #{lstm_model_forward.1} parent=1 // pred_check
      _
    $region23: #{lstm_model_forward.1} parent=1 // pred_check_branch
      %1949 = sbr.rel (0) target = $region25
    $region24: #{lstm_model_forward.1} parent=1 // pred_region
      _
    $region25: #{lstm_model_forward.1} parent=1 // pred_fallthru
      _
    %1950 = vsyncpa [#allocation3], 1

</llo_original>
